<compile_context>
chip_gen: v7x
topology: tpu7x:2x2x1
jax: 0.10.0
libtpu: 0.0.40
codegen_flags: <defaults>
</compile_context>

<pallas_src>
import functools

import jax
import jax.numpy as jnp
from jax.experimental import pallas as pl
from jax.experimental.pallas import tpu as pltpu


def _round_up(a, b):
    return (a + b - 1) // b * b


def _conv_stats_kernel(patches_ref, w_ref, b_ref, out_ref, stats_ref, *, tm, m_actual):
    """One row-tile of the im2col matmul + per-tile partial BN statistics."""
    i = pl.program_id(0)

    # (tm, KC) bf16 @ (KC, Cp) bf16 -> (tm, Cp) f32 on the MXU.
    y = jnp.dot(patches_ref[...], w_ref[...], preferred_element_type=jnp.float32)
    y = y + b_ref[...]                              # bias broadcast (1, Cp), f32
    out_ref[...] = y

    # Partial per-channel sum / sum-of-squares for batch-norm statistics.
    # Rows >= m_actual are zero-padding added by the wrapper; mask them so the
    # statistics are exact.
    row = i * tm + jax.lax.broadcasted_iota(jnp.int32, (tm, 1), 0)
    yv = jnp.where(row < m_actual, y, 0.0)
    s1 = jnp.sum(yv, axis=0, keepdims=True)         # (1, Cp)
    s2 = jnp.sum(yv * y, axis=0, keepdims=True)     # (1, Cp)
    stats_ref[...] = jnp.concatenate([s1, s2], axis=0).reshape(1, 2, s1.shape[-1])


def _affine_kernel(y_ref, scale_ref, shift_ref, o_ref):
    """Folded batch-norm: one FMA per element (lane-dense, mem-bound)."""
    o_ref[...] = y_ref[...] * scale_ref[...] + shift_ref[...]


def bn_conv_forward(x, weight, bias, gamma, beta, *, padding, dilation, eps=1e-5):
    """x: (N, C_in, H, W) NCHW.  weight: (C_out, C_in, 1, K).  bias/gamma/beta: (C_out,).
       Conv2d stride (1,1), kernel (1,K), padding (ph,pw), dilation (d,d);
       BatchNorm2d in training mode (batch statistics, biased variance)."""
    N, Cin, H, W = x.shape
    Cout, _, kh, K = weight.shape
    assert kh == 1
    ph, pw = padding
    d = dilation

    H_out = H + 2 * ph                      # kernel height = 1
    W_out = W + 2 * pw - d * (K - 1)
    M = N * H_out * W_out
    KC = K * Cin

    # ---- XLA-side glue: pad + im2col along W ----
    x_nhwc = jnp.transpose(x, (0, 2, 3, 1))                    # (N, H, W, Cin)
    x_p = jnp.pad(x_nhwc, ((0, 0), (ph, ph), (pw, pw), (0, 0)))
    cols = [x_p[:, :, k * d:k * d + W_out, :] for k in range(K)]
    patches = jnp.concatenate(cols, axis=-1).reshape(M, KC)    # (M, K*Cin)

    # Lane-dense channel dim: pad Cout up to a multiple of 128.
    Cp = _round_up(Cout, 128)
    # Row tiling: big tiles (up to 512 rows), pad M to a whole number of tiles.
    tm = min(512, _round_up(M, 128))
    M_pad = _round_up(M, tm)
    grid_m = M_pad // tm

    patches = jnp.pad(patches, ((0, M_pad - M), (0, 0))).astype(jnp.bfloat16)

    # Weight matrix: column index k*Cin + c maps to weight[f, c, 0, k].
    w_mat = jnp.transpose(weight[:, :, 0, :], (2, 1, 0)).reshape(KC, Cout)
    w_mat = jnp.pad(w_mat, ((0, 0), (0, Cp - Cout))).astype(jnp.bfloat16)
    b_row = jnp.pad(bias.astype(jnp.float32), (0, Cp - Cout)).reshape(1, Cp)
    g_pad = jnp.pad(gamma.astype(jnp.float32), (0, Cp - Cout))
    bt_pad = jnp.pad(beta.astype(jnp.float32), (0, Cp - Cout))

    # ---- Pallas kernel 1: conv matmul (MXU, f32 acc) + per-tile partial stats ----
    conv_out, part_stats = pl.pallas_call(
        functools.partial(_conv_stats_kernel, tm=tm, m_actual=M),
        out_shape=(jax.ShapeDtypeStruct((M_pad, Cp), jnp.float32),
                   jax.ShapeDtypeStruct((grid_m, 2, Cp), jnp.float32)),
        grid_spec=pltpu.PrefetchScalarGridSpec(
            num_scalar_prefetch=0,
            grid=(grid_m,),
            in_specs=[
                pl.BlockSpec((tm, KC), lambda i: (i, 0)),
                pl.BlockSpec((KC, Cp), lambda i: (0, 0)),
                pl.BlockSpec((1, Cp), lambda i: (0, 0)),
            ],
            out_specs=[
                pl.BlockSpec((tm, Cp), lambda i: (i, 0)),
                pl.BlockSpec((1, 2, Cp), lambda i: (i, 0, 0)),
            ],
        ),
        compiler_params=pltpu.CompilerParams(
            dimension_semantics=("parallel",),          # no cross-step carry -> megacore-friendly
            vmem_limit_bytes=32 * 1024 * 1024,
        ),
    )(patches, w_mat, b_row)

    # ---- tiny (2, Cp) reduction + fold BN into an affine (scale, shift), XLA-side ----
    stats = jnp.sum(part_stats, axis=0)                         # (2, Cp)
    mean = stats[0] / M
    var = jnp.maximum(stats[1] / M - mean * mean, 0.0)          # biased variance (training BN)
    inv_std = jax.lax.rsqrt(var + eps)
    scale = (g_pad * inv_std).reshape(1, Cp)
    shift = (bt_pad - mean * g_pad * inv_std).reshape(1, Cp)

    # ---- Pallas kernel 2: folded-BN affine, output aliased over conv_out's buffer ----
    bn_out = pl.pallas_call(
        _affine_kernel,
        out_shape=jax.ShapeDtypeStruct((M_pad, Cp), jnp.float32),
        grid_spec=pltpu.PrefetchScalarGridSpec(
            num_scalar_prefetch=0,
            grid=(grid_m,),
            in_specs=[
                pl.BlockSpec((tm, Cp), lambda i: (i, 0)),
                pl.BlockSpec((1, Cp), lambda i: (0, 0)),
                pl.BlockSpec((1, Cp), lambda i: (0, 0)),
            ],
            out_specs=pl.BlockSpec((tm, Cp), lambda i: (i, 0)),
        ),
        input_output_aliases={0: 0},
        compiler_params=pltpu.CompilerParams(
            dimension_semantics=("parallel",),
            vmem_limit_bytes=32 * 1024 * 1024,
        ),
    )(conv_out, scale, shift)

    # Slice off row/channel padding and go back to NCHW.
    out = bn_out[:M, :Cout].reshape(N, H_out, W_out, Cout)
    return jnp.transpose(out, (0, 3, 1, 2)).astype(x.dtype)


if __name__ == "__main__":
    # creat_bn_conv(input_size=4, filter_size=8, kernel_size=3, padding=(0,1), dilation=1)
    N, Cin, H, W = 2, 4, 16, 20
    Cout, K = 8, 3
    padding = (0, 1)
    dilation = 1
    eps = 1e-5

    key = jax.random.PRNGKey(0)
    k1, k2, k3 = jax.random.split(key, 3)
    x = jax.random.normal(k1, (N, Cin, H, W), jnp.float32)

    # deterministic parameter init (shapes match nn.Conv2d / nn.BatchNorm2d)
    fan_in = Cin * 1 * K
    weight = jax.random.normal(k2, (Cout, Cin, 1, K), jnp.float32) * (1.0 / fan_in) ** 0.5
    bias = jax.random.normal(k3, (Cout,), jnp.float32) * 0.1
    gamma = jnp.ones((Cout,), jnp.float32)   # BatchNorm2d default affine init
    beta = jnp.zeros((Cout,), jnp.float32)

    fwd = jax.jit(functools.partial(bn_conv_forward,
                                    padding=padding, dilation=dilation, eps=eps))
    out = fwd(x, weight, bias, gamma, beta)
    jax.block_until_ready(out)

    H_out = H + 2 * padding[0]
    W_out = W + 2 * padding[1] - dilation * (K - 1)
    assert out.shape == (N, Cout, H_out, W_out)

    # Reference: f32 conv (on bf16-rounded operands, matching the kernel's bf16 matmul)
    # + training-mode BatchNorm.
    xr = x.astype(jnp.bfloat16).astype(jnp.float32)
    wr = weight.astype(jnp.bfloat16).astype(jnp.float32)
    y = jax.lax.conv_general_dilated(
        xr, wr, window_strides=(1, 1),
        padding=((padding[0], padding[0]), (padding[1], padding[1])),
        rhs_dilation=(dilation, dilation),
        dimension_numbers=("NCHW", "OIHW", "NCHW"),
        precision=jax.lax.Precision.HIGHEST) + bias.reshape(1, -1, 1, 1)
    mean = y.mean(axis=(0, 2, 3), keepdims=True)
    var = y.var(axis=(0, 2, 3), keepdims=True)       # biased
    ref = (y - mean) * jax.lax.rsqrt(var + eps) * gamma.reshape(1, -1, 1, 1) \
        + beta.reshape(1, -1, 1, 1)

    max_err = float(jnp.max(jnp.abs(out - ref)))
    assert max_err < 5e-3, f"max abs error {max_err}"
    print("KERNEL_OK")
</pallas_src>

<mosaic_0001>
module attributes {stable_mosaic.version = 11 : i64} {
  func.func @_affine_kernel(%arg0: i32, %arg1: memref<512x128xf32, #tpu.memory_space<vmem>>, %arg2: memref<1x128xf32, #tpu.memory_space<vmem>>, %arg3: memref<1x128xf32, #tpu.memory_space<vmem>>, %arg4: memref<512x128xf32, #tpu.memory_space<vmem>>) attributes {dimension_semantics = [#tpu.dimension_semantics<parallel>], iteration_bounds = array<i64: 2>, scalar_prefetch = 0 : i64, scratch_operands = 0 : i64, tpu.core_type = #tpu.core_type<tc>, window_params = [{transform_indices = @transform_0, window_bounds = array<i64: 512, 128>}, {pipeline_mode = #tpu.pipeline_mode<synchronous>, transform_indices = @transform_1, window_bounds = array<i64: 1, 128>}, {pipeline_mode = #tpu.pipeline_mode<synchronous>, transform_indices = @transform_2, window_bounds = array<i64: 1, 128>}, {transform_indices = @transform_3, window_bounds = array<i64: 512, 128>}]} {
    %c0 = arith.constant 0 : index
    %c0_0 = arith.constant 0 : index
    %0 = vector.load %arg1[%c0, %c0_0] : memref<512x128xf32, #tpu.memory_space<vmem>>, vector<512x128xf32>
    %c0_1 = arith.constant 0 : index
    %c0_2 = arith.constant 0 : index
    %1 = vector.load %arg2[%c0_1, %c0_2] : memref<1x128xf32, #tpu.memory_space<vmem>>, vector<1x128xf32>
    %2 = vector.broadcast %1 : vector<1x128xf32> to vector<512x128xf32>
    %3 = arith.mulf %0, %2 : vector<512x128xf32>
    %c0_3 = arith.constant 0 : index
    %c0_4 = arith.constant 0 : index
    %4 = vector.load %arg3[%c0_3, %c0_4] : memref<1x128xf32, #tpu.memory_space<vmem>>, vector<1x128xf32>
    %5 = vector.broadcast %4 : vector<1x128xf32> to vector<512x128xf32>
    %6 = arith.addf %3, %5 : vector<512x128xf32>
    %c0_5 = arith.constant 0 : index
    %c0_6 = arith.constant 0 : index
    %7 = vector.load %arg4[%c0_5, %c0_6] : memref<512x128xf32, #tpu.memory_space<vmem>>, vector<512x128xf32>
    tpu.vector_store %arg4[%c0_5, %c0_6], %6 {strides = array<i32>} : memref<512x128xf32, #tpu.memory_space<vmem>>, vector<512x128xf32>,
    return
  }
  func.func @transform_0(%arg0: i32) -> (i32, i32) {
    %c0_i32 = arith.constant 0 : i32
    %c0_i32_0 = arith.constant 0 : i32
    return %arg0, %c0_i32 : i32, i32
  }
  func.func @transform_1(%arg0: i32) -> (i32, i32) {
    %c0_i32 = arith.constant 0 : i32
    %c0_i32_0 = arith.constant 0 : i32
    %c0_i32_1 = arith.constant 0 : i32
    return %c0_i32, %c0_i32_0 : i32, i32
  }
  func.func @transform_2(%arg0: i32) -> (i32, i32) {
    %c0_i32 = arith.constant 0 : i32
    %c0_i32_0 = arith.constant 0 : i32
    %c0_i32_1 = arith.constant 0 : i32
    return %c0_i32, %c0_i32_0 : i32, i32
  }
  func.func @transform_3(%arg0: i32) -> (i32, i32) {
    %c0_i32 = arith.constant 0 : i32
    %c0_i32_0 = arith.constant 0 : i32
    return %arg0, %c0_i32 : i32, i32
  }
}

module attributes {stable_mosaic.version = 11 : i64} {
  func.func @_conv_stats_kernel(%arg0: i32, %arg1: memref<512x12xbf16, #tpu.memory_space<vmem>>, %arg2: memref<12x128xbf16, #tpu.memory_space<vmem>>, %arg3: memref<1x128xf32, #tpu.memory_space<vmem>>, %arg4: memref<512x128xf32, #tpu.memory_space<vmem>>, %arg5: memref<1x2x128xf32, #tpu.memory_space<vmem>>) attributes {dimension_semantics = [#tpu.dimension_semantics<parallel>], iteration_bounds = array<i64: 2>, scalar_prefetch = 0 : i64, scratch_operands = 0 : i64, tpu.core_type = #tpu.core_type<tc>, window_params = [{transform_indices = @transform_0, window_bounds = array<i64: 512, 12>}, {pipeline_mode = #tpu.pipeline_mode<synchronous>, transform_indices = @transform_1, window_bounds = array<i64: 12, 128>}, {pipeline_mode = #tpu.pipeline_mode<synchronous>, transform_indices = @transform_2, window_bounds = array<i64: 1, 128>}, {transform_indices = @transform_3, window_bounds = array<i64: 512, 128>}, {transform_indices = @transform_4, window_bounds = array<i64: 1, 2, 128>}]} {
    %c0 = arith.constant 0 : index
    %c0_0 = arith.constant 0 : index
    %0 = vector.load %arg1[%c0, %c0_0] : memref<512x12xbf16, #tpu.memory_space<vmem>>, vector<512x12xbf16>
    %c0_1 = arith.constant 0 : index
    %c0_2 = arith.constant 0 : index
    %1 = vector.load %arg2[%c0_1, %c0_2] : memref<12x128xbf16, #tpu.memory_space<vmem>>, vector<12x128xbf16>
    %cst = arith.constant dense<0.000000e+00> : vector<512x128xf32>
    %2 = tpu.matmul %0, %1, %cst {dimension_numbers = #tpu.dot_dimension_numbers<[1], [0], [0], [1], [0, 0, 1, 1], [], []>} : vector<512x12xbf16>, vector<12x128xbf16>, vector<512x128xf32> -> vector<512x128xf32>
    %c0_3 = arith.constant 0 : index
    %c0_4 = arith.constant 0 : index
    %3 = vector.load %arg3[%c0_3, %c0_4] : memref<1x128xf32, #tpu.memory_space<vmem>>, vector<1x128xf32>
    %4 = vector.broadcast %3 : vector<1x128xf32> to vector<512x128xf32>
    %5 = arith.addf %2, %4 : vector<512x128xf32>
    %c0_5 = arith.constant 0 : index
    %c0_6 = arith.constant 0 : index
    %6 = vector.load %arg4[%c0_5, %c0_6] : memref<512x128xf32, #tpu.memory_space<vmem>>, vector<512x128xf32>
    tpu.vector_store %arg4[%c0_5, %c0_6], %5 {strides = array<i32>} : memref<512x128xf32, #tpu.memory_space<vmem>>, vector<512x128xf32>,
    %c512_i32 = arith.constant 512 : i32
    %7 = arith.muli %arg0, %c512_i32 : i32
    %8 = tpu.iota {dimensions = array<i32: 0>} : vector<512x1xi32>
    %9 = vector.broadcast %7 : i32 to vector<512x1xi32>
    %10 = arith.addi %9, %8 : vector<512x1xi32>
    %c640_i32 = arith.constant 640 : i32
    %11 = vector.broadcast %c640_i32 : i32 to vector<512x1xi32>
    %12 = arith.cmpi slt, %10, %11 : vector<512x1xi32>
    %cst_7 = arith.constant 0.000000e+00 : f32
    %13 = vector.shape_cast %12 : vector<512x1xi1> to vector<512x1xi1>
    %14 = vector.broadcast %13 : vector<512x1xi1> to vector<512x128xi1>
    %15 = vector.broadcast %cst_7 : f32 to vector<512x128xf32>
    %16 = arith.select %14, %5, %15 : vector<512x128xi1>, vector<512x128xf32>
    %cst_8 = arith.constant dense<0.000000e+00> : vector<128xf32>
    %17 = vector.multi_reduction <add>, %16, %cst_8 [0] : vector<512x128xf32> to vector<128xf32>
    %18 = vector.shape_cast %17 : vector<128xf32> to vector<1x128xf32>
    %19 = arith.mulf %16, %5 : vector<512x128xf32>
    %cst_9 = arith.constant dense<0.000000e+00> : vector<128xf32>
    %20 = vector.multi_reduction <add>, %19, %cst_9 [0] : vector<512x128xf32> to vector<128xf32>
    %21 = vector.shape_cast %20 : vector<128xf32> to vector<1x128xf32>
    %22 = tpu.concatenate %18, %21 in 0 : vector<1x128xf32>, vector<1x128xf32> -> vector<2x128xf32>
    %23 = vector.shape_cast %22 : vector<2x128xf32> to vector<1x2x128xf32>
    %c0_10 = arith.constant 0 : index
    %c0_11 = arith.constant 0 : index
    %c0_12 = arith.constant 0 : index
    %24 = vector.load %arg5[%c0_10, %c0_11, %c0_12] : memref<1x2x128xf32, #tpu.memory_space<vmem>>, vector<1x2x128xf32>
    tpu.vector_store %arg5[%c0_10, %c0_11, %c0_12], %23 {strides = array<i32>} : memref<1x2x128xf32, #tpu.memory_space<vmem>>, vector<1x2x128xf32>,
    return
  }
  func.func @transform_0(%arg0: i32) -> (i32, i32) {
    %c0_i32 = arith.constant 0 : i32
    %c0_i32_0 = arith.constant 0 : i32
    return %arg0, %c0_i32 : i32, i32
  }
  func.func @transform_1(%arg0: i32) -> (i32, i32) {
    %c0_i32 = arith.constant 0 : i32
    %c0_i32_0 = arith.constant 0 : i32
    %c0_i32_1 = arith.constant 0 : i32
    return %c0_i32, %c0_i32_0 : i32, i32
  }
  func.func @transform_2(%arg0: i32) -> (i32, i32) {
    %c0_i32 = arith.constant 0 : i32
    %c0_i32_0 = arith.constant 0 : i32
    %c0_i32_1 = arith.constant 0 : i32
    return %c0_i32, %c0_i32_0 : i32, i32
  }
  func.func @transform_3(%arg0: i32) -> (i32, i32) {
    %c0_i32 = arith.constant 0 : i32
    %c0_i32_0 = arith.constant 0 : i32
    return %arg0, %c0_i32 : i32, i32
  }
  func.func @transform_4(%arg0: i32) -> (i32, i32, i32) {
    %c0_i32 = arith.constant 0 : i32
    %c0_i32_0 = arith.constant 0 : i32
    %c0_i32_1 = arith.constant 0 : i32
    return %arg0, %c0_i32, %c0_i32_0 : i32, i32, i32
  }
}

</mosaic_0001>

<llo_original>
// kernel: bn_conv_forward.3
$region0: #{bn_conv_forward.3}
  #allocation0 [shape = 'u32[]', space=smem, size = 0x4, offset = 0x4, fixed_abs, tag = 'smem constant byte address 0x4 - core index']
  #allocation1 [shape = 'u32[144,128]{1,0:T(1,128)}', space=vmem, size = 0x12000, scoped, tag = 'internal scratch']
  %s0 = inlined_call_operand.vmem [shape: f32[1024,128], index: 0, kind: input, shape index: {}, may-alias: {0,3}]
  %s1 = inlined_call_operand.vmem [shape: f32[1,128], index: 1, kind: input, shape index: {}]
  %s2 = inlined_call_operand.vmem [shape: f32[1,128], index: 2, kind: input, shape index: {}]
  %s3 = inlined_call_operand.vmem [shape: f32[1024,128], index: 3, kind: output, shape index: {}, may-alias: {0,3}]
  %s4 = sld [smem:[#allocation0]]
  $region45: #{bn_conv_forward.3} parent=0
    _
  %s6 = ssub.s32 1, %s4
  %s7 = scalar_select 0, %s6, %s4
  loop: start=0, step=1, limit=4
  $region2: #{bn_conv_forward.3} parent=0 // loop_pre_header
    _
  $region3: #{bn_conv_forward.3} parent=0 // loop_header
    %s9 = sphi 0, %s13
    %p10 = scmp.ge.s32.totalorder %s9, 4
    %s19 = sphi 0, %s21
    %s22 = sphi 0, %s19
    %s23 = sphi 0, %s22
    %s39 = sphi 0, %s23
    %s43 = sphi 0, %s43
    %s45 = sphi 0, %s43
    %s46 = sphi 0, %s45
    %s60 = sphi 0, %s46
    %s64 = sphi 0, %s64
    %s66 = sphi 0, %s64
    %s67 = sphi 0, %s66
    %s81 = sphi 0, %s67
    %s87 = sphi 0, %s89
    %s90 = sphi 0, %s87
    %s91 = sphi 0, %s90
    %s107 = sphi 0, %s91
  $region4: #{bn_conv_forward.3} parent=0 // loop_header_branch
    %12 = sbr.rel (%p10) target = $region8
  $region5: #{bn_conv_forward.3} parent=0 // loop_body
    %s14 = ssub.s32 %s9, 1
    %s15 = ssub.s32 %s9, 2
    %s16 = sadd.s32 %s9, 1
    %s17 = ssub.s32 %s9, %s16
    %p18 = scmp.eq.s32.totalorder %s17, 0
    %s20 = sadd.s32 %s19, 1
    %s21 = scalar_select %p18, %s19, %s20
    %p24 = pneg %p18
    %p25 = scmp.eq.s32.totalorder %s9, 1
    %p26 = por %p24, %p25
    %p27 = scmp.ne.s32.totalorder %s19, %s22
    %p28 = scmp.eq.s32.totalorder %s9, 0
    %p29 = por %p27, %p28
    %p30 = scmp.ne.s32.totalorder %s19, %s22
    %p31 = scmp.eq.s32.totalorder %s14, 1
    %p32 = por %p30, %p31
    %p33 = scmp.ne.s32.totalorder %s22, %s23
    %p34 = scmp.eq.s32.totalorder %s14, 0
    %p35 = por %p33, %p34
    %p36 = scmp.ne.s32.totalorder %s22, %s23
    %p37 = scmp.eq.s32.totalorder %s15, 1
    %p38 = por %p36, %p37
    %p40 = scmp.ne.s32.totalorder %s23, %s39
    %p41 = scmp.eq.s32.totalorder %s15, 0
    %p42 = por %p40, %p41
    %s44 = sadd.s32 %s43, 1
    %p47 = scmp.eq.s32.totalorder %s9, 1
    %p48 = scmp.ne.s32.totalorder %s43, %s45
    %p49 = scmp.eq.s32.totalorder %s9, 0
    %p50 = por %p48, %p49
    %p51 = scmp.ne.s32.totalorder %s43, %s45
    %p52 = scmp.eq.s32.totalorder %s14, 1
    %p53 = por %p51, %p52
    %p54 = scmp.ne.s32.totalorder %s45, %s46
    %p55 = scmp.eq.s32.totalorder %s14, 0
    %p56 = por %p54, %p55
    %p57 = scmp.ne.s32.totalorder %s45, %s46
    %p58 = scmp.eq.s32.totalorder %s15, 1
    %p59 = por %p57, %p58
    %p61 = scmp.ne.s32.totalorder %s46, %s60
    %p62 = scmp.eq.s32.totalorder %s15, 0
    %p63 = por %p61, %p62
    %s65 = sadd.s32 %s64, 1
    %p68 = scmp.eq.s32.totalorder %s9, 1
    %p69 = scmp.ne.s32.totalorder %s64, %s66
    %p70 = scmp.eq.s32.totalorder %s9, 0
    %p71 = por %p69, %p70
    %p72 = scmp.ne.s32.totalorder %s64, %s66
    %p73 = scmp.eq.s32.totalorder %s14, 1
    %p74 = por %p72, %p73
    %p75 = scmp.ne.s32.totalorder %s66, %s67
    %p76 = scmp.eq.s32.totalorder %s14, 0
    %p77 = por %p75, %p76
    %p78 = scmp.ne.s32.totalorder %s66, %s67
    %p79 = scmp.eq.s32.totalorder %s15, 1
    %p80 = por %p78, %p79
    %p82 = scmp.ne.s32.totalorder %s67, %s81
    %p83 = scmp.eq.s32.totalorder %s15, 0
    %p84 = por %p82, %p83
    %s85 = ssub.s32 %s9, %s16
    %p86 = scmp.eq.s32.totalorder %s85, 0
    %s88 = sadd.s32 %s87, 1
    %s89 = scalar_select %p86, %s87, %s88
    %p92 = pneg %p86
    %p93 = scmp.eq.s32.totalorder %s9, 1
    %p94 = por %p92, %p93
    %p95 = scmp.ne.s32.totalorder %s87, %s90
    %p96 = scmp.eq.s32.totalorder %s9, 0
    %p97 = por %p95, %p96
    %p98 = scmp.ne.s32.totalorder %s87, %s90
    %p99 = scmp.eq.s32.totalorder %s14, 1
    %p100 = por %p98, %p99
    %p101 = scmp.ne.s32.totalorder %s90, %s91
    %p102 = scmp.eq.s32.totalorder %s14, 0
    %p103 = por %p101, %p102
    %p104 = scmp.ne.s32.totalorder %s90, %s91
    %p105 = scmp.eq.s32.totalorder %s15, 1
    %p106 = por %p104, %p105
    %p108 = scmp.ne.s32.totalorder %s91, %s107
    %p109 = scmp.eq.s32.totalorder %s15, 0
    %p110 = por %p108, %p109
    %p111 = scmp.le.s32.totalorder 1, %s9
    %p112 = scmp.lt.s32.totalorder %s9, 3
    %p113 = pnand %p111, %p112
    %p114 = pneg %p113
    // Predicated region
    $region9: #{bn_conv_forward.3} parent=5 // pred_check
      _
    $region10: #{bn_conv_forward.3} parent=5 // pred_check_branch
      %116 = sbr.rel (%p113) target = $region12
    $region11: #{bn_conv_forward.3} parent=5 // pred_region
      %s117 = ssub.s32 %s9, 1
      // Predicated region
      $region13: #{bn_conv_forward.3} parent=11 // pred_check
        %p118 = pneg %p56
      $region14: #{bn_conv_forward.3} parent=11 // pred_check_branch
        %120 = sbr.rel (%p118) target = $region16
      $region15: #{bn_conv_forward.3} parent=11 // pred_region
        _
      $region16: #{bn_conv_forward.3} parent=11 // pred_fallthru
        _
      // Predicated region
      $region17: #{bn_conv_forward.3} parent=11 // pred_check
        %p121 = pneg %p77
      $region18: #{bn_conv_forward.3} parent=11 // pred_check_branch
        %123 = sbr.rel (%p121) target = $region20
      $region19: #{bn_conv_forward.3} parent=11 // pred_region
        _
      $region20: #{bn_conv_forward.3} parent=11 // pred_fallthru
        _
    $region12: #{bn_conv_forward.3} parent=5 // pred_fallthru
      _
    %p124 = scmp.lt.s32.totalorder %s9, 2
    // Predicated region
    $region21: #{bn_conv_forward.3} parent=5 // pred_check
      %p125 = pneg %p124
    $region22: #{bn_conv_forward.3} parent=5 // pred_check_branch
      %127 = sbr.rel (%p125) target = $region24
    $region23: #{bn_conv_forward.3} parent=5 // pred_region
      // Predicated region
      $region25: #{bn_conv_forward.3} parent=23 // pred_check
        %p128 = pneg %p29
      $region26: #{bn_conv_forward.3} parent=23 // pred_check_branch
        %130 = sbr.rel (%p128) target = $region28
      $region27: #{bn_conv_forward.3} parent=23 // pred_region
        %s131 = smul.u32 64, %s9
        %p132 = scmp.lt.s32.totalorder %s131, 127
        %s133 = scalar_select %p132, %s131, 127
        %s134 = smul.addr %s133, 8
        %s135 = scalar_lea.vmem %s0, %s134
        %s136 = smul.u32 64, %s9
      $region28: #{bn_conv_forward.3} parent=23 // pred_fallthru
        _
    $region24: #{bn_conv_forward.3} parent=5 // pred_fallthru
      _
    %p137 = scmp.le.s32.totalorder 1, %s9
    %p138 = scmp.lt.s32.totalorder %s9, 3
    %p139 = pnand %p137, %p138
    %p140 = pneg %p139
    // Predicated region
    $region29: #{bn_conv_forward.3} parent=5 // pred_check
      _
    $region30: #{bn_conv_forward.3} parent=5 // pred_check_branch
      %142 = sbr.rel (%p139) target = $region32
    $region31: #{bn_conv_forward.3} parent=5 // pred_region
      %s143 = ssub.s32 %s9, 1
      %s144 = smul.u32 64, %s14
      %p145 = scmp.lt.s32.totalorder %s144, 127
      %s146 = scalar_select %p145, %s144, 127
      %s147 = smul.addr %s146, 8
      %s148 = scalar_lea.vmem %s0, %s147
      %p149 = pneg %p35
      %p150 = pneg %p32
      %p151 = pneg %p56
      %p152 = pneg %p53
      %p153 = pneg %p77
      %p154 = pneg %p74
      %p155 = pneg %p103
      %p156 = pneg %p100
      %s157 = smul.u32 64, %s14
      %p158 = scmp.lt.s32.totalorder %s157, 127
      %s159 = scalar_select %p158, %s157, 127
      %s160 = smul.addr %s159, 8
      %s161 = scalar_lea.vmem %s3, %s160
      %s162 = smul.u32 64, %s14
      %p163 = scmp.lt.s32.totalorder %s162, 127
      %s164 = scalar_select %p163, %s162, 127
      %s165 = smul.addr %s164, 8
      %s166 = scalar_lea.vmem %s0, %s165
      %s167 = smul.u32 64, %s14
      %s168 = smul.u32 64, %s14
      %p169 = scmp.lt.s32.totalorder %s168, 127
      %s170 = scalar_select %p169, %s168, 127
      %s171 = smul.addr %s170, 8
      %s172 = scalar_lea.vmem %s3, %s171
      %s173 = smul.u32 64, %s14
      %v174 = vld [vmem:[%s166] sm:$0xff]
      %v175 = vld [vmem:[%s166 + $0x8] sm:$0xff]
      %v176 = vld [vmem:[%s166 + $0x10] sm:$0xff]
      %v177 = vld [vmem:[%s166 + $0x18] sm:$0xff]
      %v178 = vld [vmem:[%s166 + $0x20] sm:$0xff]
      %v179 = vld [vmem:[%s166 + $0x28] sm:$0xff]
      %v180 = vld [vmem:[%s166 + $0x30] sm:$0xff]
      %v181 = vld [vmem:[%s166 + $0x38] sm:$0xff]
      %v182 = vld [vmem:[%s166 + $0x40] sm:$0xff]
      %v183 = vld [vmem:[%s166 + $0x48] sm:$0xff]
      %v184 = vld [vmem:[%s166 + $0x50] sm:$0xff]
      %v185 = vld [vmem:[%s166 + $0x58] sm:$0xff]
      %v186 = vld [vmem:[%s166 + $0x60] sm:$0xff]
      %v187 = vld [vmem:[%s166 + $0x68] sm:$0xff]
      %v188 = vld [vmem:[%s166 + $0x70] sm:$0xff]
      %v189 = vld [vmem:[%s166 + $0x78] sm:$0xff]
      %v190 = vld [vmem:[%s166 + $0x80] sm:$0xff]
      %v191 = vld [vmem:[%s166 + $0x88] sm:$0xff]
      %v192 = vld [vmem:[%s166 + $0x90] sm:$0xff]
      %v193 = vld [vmem:[%s166 + $0x98] sm:$0xff]
      %v194 = vld [vmem:[%s166 + $0xa0] sm:$0xff]
      %v195 = vld [vmem:[%s166 + $0xa8] sm:$0xff]
      %v196 = vld [vmem:[%s166 + $0xb0] sm:$0xff]
      %v197 = vld [vmem:[%s166 + $0xb8] sm:$0xff]
      %v198 = vld [vmem:[%s166 + $0xc0] sm:$0xff]
      %v199 = vld [vmem:[%s166 + $0xc8] sm:$0xff]
      %v200 = vld [vmem:[%s166 + $0xd0] sm:$0xff]
      %v201 = vld [vmem:[%s166 + $0xd8] sm:$0xff]
      %v202 = vld [vmem:[%s166 + $0xe0] sm:$0xff]
      %v203 = vld [vmem:[%s166 + $0xe8] sm:$0xff]
      %v204 = vld [vmem:[%s166 + $0xf0] sm:$0xff]
      %v205 = vld [vmem:[%s166 + $0xf8] sm:$0xff]
      %v206 = vld [vmem:[%s166 + $0x100] sm:$0xff]
      %v207 = vld [vmem:[%s166 + $0x108] sm:$0xff]
      %v208 = vld [vmem:[%s166 + $0x110] sm:$0xff]
      %v209 = vld [vmem:[%s166 + $0x118] sm:$0xff]
      %v210 = vld [vmem:[%s166 + $0x120] sm:$0xff]
      %v211 = vld [vmem:[%s166 + $0x128] sm:$0xff]
      %v212 = vld [vmem:[%s166 + $0x130] sm:$0xff]
      %v213 = vld [vmem:[%s166 + $0x138] sm:$0xff]
      %v214 = vld [vmem:[%s166 + $0x140] sm:$0xff]
      %v215 = vld [vmem:[%s166 + $0x148] sm:$0xff]
      %v216 = vld [vmem:[%s166 + $0x150] sm:$0xff]
      %v217 = vld [vmem:[%s166 + $0x158] sm:$0xff]
      %v218 = vld [vmem:[%s166 + $0x160] sm:$0xff]
      %v219 = vld [vmem:[%s166 + $0x168] sm:$0xff]
      %v220 = vld [vmem:[%s166 + $0x170] sm:$0xff]
      %v221 = vld [vmem:[%s166 + $0x178] sm:$0xff]
      %v222 = vld [vmem:[%s166 + $0x180] sm:$0xff]
      %v223 = vld [vmem:[%s166 + $0x188] sm:$0xff]
      %v224 = vld [vmem:[%s166 + $0x190] sm:$0xff]
      %v225 = vld [vmem:[%s166 + $0x198] sm:$0xff]
      %v226 = vld [vmem:[%s166 + $0x1a0] sm:$0xff]
      %v227 = vld [vmem:[%s166 + $0x1a8] sm:$0xff]
      %v228 = vld [vmem:[%s166 + $0x1b0] sm:$0xff]
      %v229 = vld [vmem:[%s166 + $0x1b8] sm:$0xff]
      %v230 = vld [vmem:[%s166 + $0x1c0] sm:$0xff]
      %v231 = vld [vmem:[%s166 + $0x1c8] sm:$0xff]
      %v232 = vld [vmem:[%s166 + $0x1d0] sm:$0xff]
      %v233 = vld [vmem:[%s166 + $0x1d8] sm:$0xff]
      %v234 = vld [vmem:[%s166 + $0x1e0] sm:$0xff]
      %v235 = vld [vmem:[%s166 + $0x1e8] sm:$0xff]
      %v236 = vld [vmem:[%s166 + $0x1f0] sm:$0xff]
      %v237 = vld [vmem:[%s166 + $0x1f8] sm:$0xff]
      %v238 = vld [vmem:[%s1] sm:$0x1]
      %v240 = vlaneseq
      %v241 = vshrl.u32 %v240, 7
      %v242 = vsub.s32 0, %v241
      %v243 = vrot.slane %v238, %v242
      %v245 = vmul.f32 %v174, %v243
      %v246 = vmul.f32 %v175, %v243
      %v247 = vmul.f32 %v176, %v243
      %v248 = vmul.f32 %v177, %v243
      %v249 = vmul.f32 %v178, %v243
      %v250 = vmul.f32 %v179, %v243
      %v251 = vmul.f32 %v180, %v243
      %v252 = vmul.f32 %v181, %v243
      %v253 = vmul.f32 %v182, %v243
      %v254 = vmul.f32 %v183, %v243
      %v255 = vmul.f32 %v184, %v243
      %v256 = vmul.f32 %v185, %v243
      %v257 = vmul.f32 %v186, %v243
      %v258 = vmul.f32 %v187, %v243
      %v259 = vmul.f32 %v188, %v243
      %v260 = vmul.f32 %v189, %v243
      %v261 = vmul.f32 %v190, %v243
      %v262 = vmul.f32 %v191, %v243
      %v263 = vmul.f32 %v192, %v243
      %v264 = vmul.f32 %v193, %v243
      %v265 = vmul.f32 %v194, %v243
      %v266 = vmul.f32 %v195, %v243
      %v267 = vmul.f32 %v196, %v243
      %v268 = vmul.f32 %v197, %v243
      %v269 = vmul.f32 %v198, %v243
      %v270 = vmul.f32 %v199, %v243
      %v271 = vmul.f32 %v200, %v243
      %v272 = vmul.f32 %v201, %v243
      %v273 = vmul.f32 %v202, %v243
      %v274 = vmul.f32 %v203, %v243
      %v275 = vmul.f32 %v204, %v243
      %v276 = vmul.f32 %v205, %v243
      %v277 = vmul.f32 %v206, %v243
      %v278 = vmul.f32 %v207, %v243
      %v279 = vmul.f32 %v208, %v243
      %v280 = vmul.f32 %v209, %v243
      %v281 = vmul.f32 %v210, %v243
      %v282 = vmul.f32 %v211, %v243
      %v283 = vmul.f32 %v212, %v243
      %v284 = vmul.f32 %v213, %v243
      %v285 = vmul.f32 %v214, %v243
      %v286 = vmul.f32 %v215, %v243
      %v287 = vmul.f32 %v216, %v243
      %v288 = vmul.f32 %v217, %v243
      %v289 = vmul.f32 %v218, %v243
      %v290 = vmul.f32 %v219, %v243
      %v291 = vmul.f32 %v220, %v243
      %v292 = vmul.f32 %v221, %v243
      %v293 = vmul.f32 %v222, %v243
      %v294 = vmul.f32 %v223, %v243
      %v295 = vmul.f32 %v224, %v243
      %v296 = vmul.f32 %v225, %v243
      %v297 = vmul.f32 %v226, %v243
      %v298 = vmul.f32 %v227, %v243
      %v299 = vmul.f32 %v228, %v243
      %v300 = vmul.f32 %v229, %v243
      %v301 = vmul.f32 %v230, %v243
      %v302 = vmul.f32 %v231, %v243
      %v303 = vmul.f32 %v232, %v243
      %v304 = vmul.f32 %v233, %v243
      %v305 = vmul.f32 %v234, %v243
      %v306 = vmul.f32 %v235, %v243
      %v307 = vmul.f32 %v236, %v243
      %v308 = vmul.f32 %v237, %v243
      %v309 = vld [vmem:[%s2] sm:$0x1]
      %v311 = vlaneseq
      %v312 = vshrl.u32 %v311, 7
      %v313 = vsub.s32 0, %v312
      %v314 = vrot.slane %v309, %v313
      %v316 = vadd.f32 %v245, %v314
      %v317 = vadd.f32 %v246, %v314
      %v318 = vadd.f32 %v247, %v314
      %v319 = vadd.f32 %v248, %v314
      %v320 = vadd.f32 %v249, %v314
      %v321 = vadd.f32 %v250, %v314
      %v322 = vadd.f32 %v251, %v314
      %v323 = vadd.f32 %v252, %v314
      %v324 = vadd.f32 %v253, %v314
      %v325 = vadd.f32 %v254, %v314
      %v326 = vadd.f32 %v255, %v314
      %v327 = vadd.f32 %v256, %v314
      %v328 = vadd.f32 %v257, %v314
      %v329 = vadd.f32 %v258, %v314
      %v330 = vadd.f32 %v259, %v314
      %v331 = vadd.f32 %v260, %v314
      %v332 = vadd.f32 %v261, %v314
      %v333 = vadd.f32 %v262, %v314
      %v334 = vadd.f32 %v263, %v314
      %v335 = vadd.f32 %v264, %v314
      %v336 = vadd.f32 %v265, %v314
      %v337 = vadd.f32 %v266, %v314
      %v338 = vadd.f32 %v267, %v314
      %v339 = vadd.f32 %v268, %v314
      %v340 = vadd.f32 %v269, %v314
      %v341 = vadd.f32 %v270, %v314
      %v342 = vadd.f32 %v271, %v314
      %v343 = vadd.f32 %v272, %v314
      %v344 = vadd.f32 %v273, %v314
      %v345 = vadd.f32 %v274, %v314
      %v346 = vadd.f32 %v275, %v314
      %v347 = vadd.f32 %v276, %v314
      %v348 = vadd.f32 %v277, %v314
      %v349 = vadd.f32 %v278, %v314
      %v350 = vadd.f32 %v279, %v314
      %v351 = vadd.f32 %v280, %v314
      %v352 = vadd.f32 %v281, %v314
      %v353 = vadd.f32 %v282, %v314
      %v354 = vadd.f32 %v283, %v314
      %v355 = vadd.f32 %v284, %v314
      %v356 = vadd.f32 %v285, %v314
      %v357 = vadd.f32 %v286, %v314
      %v358 = vadd.f32 %v287, %v314
      %v359 = vadd.f32 %v288, %v314
      %v360 = vadd.f32 %v289, %v314
      %v361 = vadd.f32 %v290, %v314
      %v362 = vadd.f32 %v291, %v314
      %v363 = vadd.f32 %v292, %v314
      %v364 = vadd.f32 %v293, %v314
      %v365 = vadd.f32 %v294, %v314
      %v366 = vadd.f32 %v295, %v314
      %v367 = vadd.f32 %v296, %v314
      %v368 = vadd.f32 %v297, %v314
      %v369 = vadd.f32 %v298, %v314
      %v370 = vadd.f32 %v299, %v314
      %v371 = vadd.f32 %v300, %v314
      %v372 = vadd.f32 %v301, %v314
      %v373 = vadd.f32 %v302, %v314
      %v374 = vadd.f32 %v303, %v314
      %v375 = vadd.f32 %v304, %v314
      %v376 = vadd.f32 %v305, %v314
      %v377 = vadd.f32 %v306, %v314
      %v378 = vadd.f32 %v307, %v314
      %v379 = vadd.f32 %v308, %v314
      %380 = vst [vmem:[%s172] sm:$0xff] %v316
      %381 = vst [vmem:[%s172 + $0x8] sm:$0xff] %v317
      %382 = vst [vmem:[%s172 + $0x10] sm:$0xff] %v318
      %383 = vst [vmem:[%s172 + $0x18] sm:$0xff] %v319
      %384 = vst [vmem:[%s172 + $0x20] sm:$0xff] %v320
      %385 = vst [vmem:[%s172 + $0x28] sm:$0xff] %v321
      %386 = vst [vmem:[%s172 + $0x30] sm:$0xff] %v322
      %387 = vst [vmem:[%s172 + $0x38] sm:$0xff] %v323
      %388 = vst [vmem:[%s172 + $0x40] sm:$0xff] %v324
      %389 = vst [vmem:[%s172 + $0x48] sm:$0xff] %v325
      %390 = vst [vmem:[%s172 + $0x50] sm:$0xff] %v326
      %391 = vst [vmem:[%s172 + $0x58] sm:$0xff] %v327
      %392 = vst [vmem:[%s172 + $0x60] sm:$0xff] %v328
      %393 = vst [vmem:[%s172 + $0x68] sm:$0xff] %v329
      %394 = vst [vmem:[%s172 + $0x70] sm:$0xff] %v330
      %395 = vst [vmem:[%s172 + $0x78] sm:$0xff] %v331
      %396 = vst [vmem:[%s172 + $0x80] sm:$0xff] %v332
      %397 = vst [vmem:[%s172 + $0x88] sm:$0xff] %v333
      %398 = vst [vmem:[%s172 + $0x90] sm:$0xff] %v334
      %399 = vst [vmem:[%s172 + $0x98] sm:$0xff] %v335
      %400 = vst [vmem:[%s172 + $0xa0] sm:$0xff] %v336
      %401 = vst [vmem:[%s172 + $0xa8] sm:$0xff] %v337
      %402 = vst [vmem:[%s172 + $0xb0] sm:$0xff] %v338
      %403 = vst [vmem:[%s172 + $0xb8] sm:$0xff] %v339
      %404 = vst [vmem:[%s172 + $0xc0] sm:$0xff] %v340
      %405 = vst [vmem:[%s172 + $0xc8] sm:$0xff] %v341
      %406 = vst [vmem:[%s172 + $0xd0] sm:$0xff] %v342
      %407 = vst [vmem:[%s172 + $0xd8] sm:$0xff] %v343
      %408 = vst [vmem:[%s172 + $0xe0] sm:$0xff] %v344
      %409 = vst [vmem:[%s172 + $0xe8] sm:$0xff] %v345
      %410 = vst [vmem:[%s172 + $0xf0] sm:$0xff] %v346
      %411 = vst [vmem:[%s172 + $0xf8] sm:$0xff] %v347
      %412 = vst [vmem:[%s172 + $0x100] sm:$0xff] %v348
      %413 = vst [vmem:[%s172 + $0x108] sm:$0xff] %v349
      %414 = vst [vmem:[%s172 + $0x110] sm:$0xff] %v350
      %415 = vst [vmem:[%s172 + $0x118] sm:$0xff] %v351
      %416 = vst [vmem:[%s172 + $0x120] sm:$0xff] %v352
      %417 = vst [vmem:[%s172 + $0x128] sm:$0xff] %v353
      %418 = vst [vmem:[%s172 + $0x130] sm:$0xff] %v354
      %419 = vst [vmem:[%s172 + $0x138] sm:$0xff] %v355
      %420 = vst [vmem:[%s172 + $0x140] sm:$0xff] %v356
      %421 = vst [vmem:[%s172 + $0x148] sm:$0xff] %v357
      %422 = vst [vmem:[%s172 + $0x150] sm:$0xff] %v358
      %423 = vst [vmem:[%s172 + $0x158] sm:$0xff] %v359
      %424 = vst [vmem:[%s172 + $0x160] sm:$0xff] %v360
      %425 = vst [vmem:[%s172 + $0x168] sm:$0xff] %v361
      %426 = vst [vmem:[%s172 + $0x170] sm:$0xff] %v362
      %427 = vst [vmem:[%s172 + $0x178] sm:$0xff] %v363
      %428 = vst [vmem:[%s172 + $0x180] sm:$0xff] %v364
      %429 = vst [vmem:[%s172 + $0x188] sm:$0xff] %v365
      %430 = vst [vmem:[%s172 + $0x190] sm:$0xff] %v366
      %431 = vst [vmem:[%s172 + $0x198] sm:$0xff] %v367
      %432 = vst [vmem:[%s172 + $0x1a0] sm:$0xff] %v368
      %433 = vst [vmem:[%s172 + $0x1a8] sm:$0xff] %v369
      %434 = vst [vmem:[%s172 + $0x1b0] sm:$0xff] %v370
      %435 = vst [vmem:[%s172 + $0x1b8] sm:$0xff] %v371
      %436 = vst [vmem:[%s172 + $0x1c0] sm:$0xff] %v372
      %437 = vst [vmem:[%s172 + $0x1c8] sm:$0xff] %v373
      %438 = vst [vmem:[%s172 + $0x1d0] sm:$0xff] %v374
      %439 = vst [vmem:[%s172 + $0x1d8] sm:$0xff] %v375
      %440 = vst [vmem:[%s172 + $0x1e0] sm:$0xff] %v376
      %441 = vst [vmem:[%s172 + $0x1e8] sm:$0xff] %v377
      %442 = vst [vmem:[%s172 + $0x1f0] sm:$0xff] %v378
      %443 = vst [vmem:[%s172 + $0x1f8] sm:$0xff] %v379
      %s444 = smul.u32 64, %s14
      %p445 = scmp.lt.s32.totalorder %s444, 127
      %s446 = scalar_select %p445, %s444, 127
      %s447 = smul.addr %s446, 8
      %s448 = scalar_lea.vmem %s3, %s447
      // Predicated region
      $region33: #{bn_conv_forward.3} parent=31 // pred_check
        %p449 = pneg %p100
      $region34: #{bn_conv_forward.3} parent=31 // pred_check_branch
        %451 = sbr.rel (%p449) target = $region36
      $region35: #{bn_conv_forward.3} parent=31 // pred_region
        %s452 = smul.u32 64, %s14
      $region36: #{bn_conv_forward.3} parent=31 // pred_fallthru
        _
    $region32: #{bn_conv_forward.3} parent=5 // pred_fallthru
      _
    %p453 = scmp.le.s32.totalorder 2, %s9
    // Predicated region
    $region37: #{bn_conv_forward.3} parent=5 // pred_check
      %p454 = pneg %p453
    $region38: #{bn_conv_forward.3} parent=5 // pred_check_branch
      %456 = sbr.rel (%p454) target = $region40
    $region39: #{bn_conv_forward.3} parent=5 // pred_region
      %s457 = ssub.s32 %s9, 2
      // Predicated region
      $region41: #{bn_conv_forward.3} parent=39 // pred_check
        %p458 = pneg %p106
      $region42: #{bn_conv_forward.3} parent=39 // pred_check_branch
        %460 = sbr.rel (%p458) target = $region44
      $region43: #{bn_conv_forward.3} parent=39 // pred_region
        %s461 = smul.u32 64, %s15
        %p462 = scmp.lt.s32.totalorder %s461, 127
        %s463 = scalar_select %p462, %s461, 127
        %s464 = smul.addr %s463, 8
        %s465 = scalar_lea.vmem %s3, %s464
      $region44: #{bn_conv_forward.3} parent=39 // pred_fallthru
        _
    $region40: #{bn_conv_forward.3} parent=5 // pred_fallthru
      _
  $region6: #{bn_conv_forward.3} parent=0 // loop_footer
    %s13 = sadd.s32 1, %s9
  $region7: #{bn_conv_forward.3} parent=0 // loop_footer_branch
    %8 = sbr.rel target = $region3
  $region8: #{bn_conv_forward.3} parent=0 // loop_exit
    _

// kernel: bn_conv_forward.2
$region0: #{bn_conv_forward.2}
  #allocation0 [shape = 'u32[]', space=smem, size = 0x4, offset = 0x4, fixed_abs, tag = 'smem constant byte address 0x4 - core index']
  #allocation1 [shape = 'u32[144,128]{1,0:T(1,128)}', space=vmem, size = 0x12000, scoped, tag = 'internal scratch']
  %s0 = inlined_call_operand.vmem [shape: bf16[1024,12], index: 0, kind: input, shape index: {}]
  %s1 = inlined_call_operand.vmem [shape: bf16[12,128], index: 1, kind: input, shape index: {}]
  %s2 = inlined_call_operand.vmem [shape: f32[1,128], index: 2, kind: input, shape index: {}]
  %s3 = inlined_call_operand.vmem [shape: f32[1024,128], index: 3, kind: output, shape index: {0}]
  %s4 = inlined_call_operand.vmem [shape: f32[2,2,128], index: 4, kind: output, shape index: {1}]
  %5 = xla_tuple %s3, %s4
  %s6 = sld [smem:[#allocation0]]
  $region53: #{bn_conv_forward.2} parent=0
    _
  %s8 = ssub.s32 1, %s6
  %s9 = scalar_select 0, %s8, %s6
  loop: start=0, step=1, limit=4
  $region2: #{bn_conv_forward.2} parent=0 // loop_pre_header
    _
  $region3: #{bn_conv_forward.2} parent=0 // loop_header
    %s11 = sphi 0, %s15
    %p12 = scmp.ge.s32.totalorder %s11, 4
    %s21 = sphi 0, %s23
    %s24 = sphi 0, %s21
    %s25 = sphi 0, %s24
    %s41 = sphi 0, %s25
    %s45 = sphi 0, %s45
    %s47 = sphi 0, %s45
    %s48 = sphi 0, %s47
    %s62 = sphi 0, %s48
    %s66 = sphi 0, %s66
    %s68 = sphi 0, %s66
    %s69 = sphi 0, %s68
    %s83 = sphi 0, %s69
    %s89 = sphi 0, %s91
    %s92 = sphi 0, %s89
    %s93 = sphi 0, %s92
    %s109 = sphi 0, %s93
    %s115 = sphi 0, %s117
    %s118 = sphi 0, %s115
    %s119 = sphi 0, %s118
    %s135 = sphi 0, %s119
  $region4: #{bn_conv_forward.2} parent=0 // loop_header_branch
    %14 = sbr.rel (%p12) target = $region8
  $region5: #{bn_conv_forward.2} parent=0 // loop_body
    %s16 = ssub.s32 %s11, 1
    %s17 = ssub.s32 %s11, 2
    %s18 = sadd.s32 %s11, 1
    %s19 = ssub.s32 %s11, %s18
    %p20 = scmp.eq.s32.totalorder %s19, 0
    %s22 = sadd.s32 %s21, 1
    %s23 = scalar_select %p20, %s21, %s22
    %p26 = pneg %p20
    %p27 = scmp.eq.s32.totalorder %s11, 1
    %p28 = por %p26, %p27
    %p29 = scmp.ne.s32.totalorder %s21, %s24
    %p30 = scmp.eq.s32.totalorder %s11, 0
    %p31 = por %p29, %p30
    %p32 = scmp.ne.s32.totalorder %s21, %s24
    %p33 = scmp.eq.s32.totalorder %s16, 1
    %p34 = por %p32, %p33
    %p35 = scmp.ne.s32.totalorder %s24, %s25
    %p36 = scmp.eq.s32.totalorder %s16, 0
    %p37 = por %p35, %p36
    %p38 = scmp.ne.s32.totalorder %s24, %s25
    %p39 = scmp.eq.s32.totalorder %s17, 1
    %p40 = por %p38, %p39
    %p42 = scmp.ne.s32.totalorder %s25, %s41
    %p43 = scmp.eq.s32.totalorder %s17, 0
    %p44 = por %p42, %p43
    %s46 = sadd.s32 %s45, 1
    %p49 = scmp.eq.s32.totalorder %s11, 1
    %p50 = scmp.ne.s32.totalorder %s45, %s47
    %p51 = scmp.eq.s32.totalorder %s11, 0
    %p52 = por %p50, %p51
    %p53 = scmp.ne.s32.totalorder %s45, %s47
    %p54 = scmp.eq.s32.totalorder %s16, 1
    %p55 = por %p53, %p54
    %p56 = scmp.ne.s32.totalorder %s47, %s48
    %p57 = scmp.eq.s32.totalorder %s16, 0
    %p58 = por %p56, %p57
    %p59 = scmp.ne.s32.totalorder %s47, %s48
    %p60 = scmp.eq.s32.totalorder %s17, 1
    %p61 = por %p59, %p60
    %p63 = scmp.ne.s32.totalorder %s48, %s62
    %p64 = scmp.eq.s32.totalorder %s17, 0
    %p65 = por %p63, %p64
    %s67 = sadd.s32 %s66, 1
    %p70 = scmp.eq.s32.totalorder %s11, 1
    %p71 = scmp.ne.s32.totalorder %s66, %s68
    %p72 = scmp.eq.s32.totalorder %s11, 0
    %p73 = por %p71, %p72
    %p74 = scmp.ne.s32.totalorder %s66, %s68
    %p75 = scmp.eq.s32.totalorder %s16, 1
    %p76 = por %p74, %p75
    %p77 = scmp.ne.s32.totalorder %s68, %s69
    %p78 = scmp.eq.s32.totalorder %s16, 0
    %p79 = por %p77, %p78
    %p80 = scmp.ne.s32.totalorder %s68, %s69
    %p81 = scmp.eq.s32.totalorder %s17, 1
    %p82 = por %p80, %p81
    %p84 = scmp.ne.s32.totalorder %s69, %s83
    %p85 = scmp.eq.s32.totalorder %s17, 0
    %p86 = por %p84, %p85
    %s87 = ssub.s32 %s11, %s18
    %p88 = scmp.eq.s32.totalorder %s87, 0
    %s90 = sadd.s32 %s89, 1
    %s91 = scalar_select %p88, %s89, %s90
    %p94 = pneg %p88
    %p95 = scmp.eq.s32.totalorder %s11, 1
    %p96 = por %p94, %p95
    %p97 = scmp.ne.s32.totalorder %s89, %s92
    %p98 = scmp.eq.s32.totalorder %s11, 0
    %p99 = por %p97, %p98
    %p100 = scmp.ne.s32.totalorder %s89, %s92
    %p101 = scmp.eq.s32.totalorder %s16, 1
    %p102 = por %p100, %p101
    %p103 = scmp.ne.s32.totalorder %s92, %s93
    %p104 = scmp.eq.s32.totalorder %s16, 0
    %p105 = por %p103, %p104
    %p106 = scmp.ne.s32.totalorder %s92, %s93
    %p107 = scmp.eq.s32.totalorder %s17, 1
    %p108 = por %p106, %p107
    %p110 = scmp.ne.s32.totalorder %s93, %s109
    %p111 = scmp.eq.s32.totalorder %s17, 0
    %p112 = por %p110, %p111
    %s113 = ssub.s32 %s11, %s18
    %p114 = scmp.eq.s32.totalorder %s113, 0
    %s116 = sadd.s32 %s115, 1
    %s117 = scalar_select %p114, %s115, %s116
    %p120 = pneg %p114
    %p121 = scmp.eq.s32.totalorder %s11, 1
    %p122 = por %p120, %p121
    %p123 = scmp.ne.s32.totalorder %s115, %s118
    %p124 = scmp.eq.s32.totalorder %s11, 0
    %p125 = por %p123, %p124
    %p126 = scmp.ne.s32.totalorder %s115, %s118
    %p127 = scmp.eq.s32.totalorder %s16, 1
    %p128 = por %p126, %p127
    %p129 = scmp.ne.s32.totalorder %s118, %s119
    %p130 = scmp.eq.s32.totalorder %s16, 0
    %p131 = por %p129, %p130
    %p132 = scmp.ne.s32.totalorder %s118, %s119
    %p133 = scmp.eq.s32.totalorder %s17, 1
    %p134 = por %p132, %p133
    %p136 = scmp.ne.s32.totalorder %s119, %s135
    %p137 = scmp.eq.s32.totalorder %s17, 0
    %p138 = por %p136, %p137
    %p139 = scmp.le.s32.totalorder 1, %s11
    %p140 = scmp.lt.s32.totalorder %s11, 3
    %p141 = pnand %p139, %p140
    %p142 = pneg %p141
    // Predicated region
    $region9: #{bn_conv_forward.2} parent=5 // pred_check
      _
    $region10: #{bn_conv_forward.2} parent=5 // pred_check_branch
      %144 = sbr.rel (%p141) target = $region12
    $region11: #{bn_conv_forward.2} parent=5 // pred_region
      %s145 = ssub.s32 %s11, 1
      // Predicated region
      $region13: #{bn_conv_forward.2} parent=11 // pred_check
        %p146 = pneg %p58
      $region14: #{bn_conv_forward.2} parent=11 // pred_check_branch
        %148 = sbr.rel (%p146) target = $region16
      $region15: #{bn_conv_forward.2} parent=11 // pred_region
        _
      $region16: #{bn_conv_forward.2} parent=11 // pred_fallthru
        _
      // Predicated region
      $region17: #{bn_conv_forward.2} parent=11 // pred_check
        %p149 = pneg %p79
      $region18: #{bn_conv_forward.2} parent=11 // pred_check_branch
        %151 = sbr.rel (%p149) target = $region20
      $region19: #{bn_conv_forward.2} parent=11 // pred_region
        _
      $region20: #{bn_conv_forward.2} parent=11 // pred_fallthru
        _
    $region12: #{bn_conv_forward.2} parent=5 // pred_fallthru
      _
    %p152 = scmp.lt.s32.totalorder %s11, 2
    // Predicated region
    $region21: #{bn_conv_forward.2} parent=5 // pred_check
      %p153 = pneg %p152
    $region22: #{bn_conv_forward.2} parent=5 // pred_check_branch
      %155 = sbr.rel (%p153) target = $region24
    $region23: #{bn_conv_forward.2} parent=5 // pred_region
      // Predicated region
      $region25: #{bn_conv_forward.2} parent=23 // pred_check
        %p156 = pneg %p31
      $region26: #{bn_conv_forward.2} parent=23 // pred_check_branch
        %158 = sbr.rel (%p156) target = $region28
      $region27: #{bn_conv_forward.2} parent=23 // pred_region
        %s159 = smul.u32 64, %s11
        %p160 = scmp.lt.s32.totalorder %s159, 127
        %s161 = scalar_select %p160, %s159, 127
        %s162 = smul.addr %s161, 4
        %s163 = scalar_lea.vmem %s0, %s162
        %s164 = smul.u32 64, %s11
      $region28: #{bn_conv_forward.2} parent=23 // pred_fallthru
        _
    $region24: #{bn_conv_forward.2} parent=5 // pred_fallthru
      _
    %p165 = scmp.le.s32.totalorder 1, %s11
    %p166 = scmp.lt.s32.totalorder %s11, 3
    %p167 = pnand %p165, %p166
    %p168 = pneg %p167
    // Predicated region
    $region29: #{bn_conv_forward.2} parent=5 // pred_check
      _
    $region30: #{bn_conv_forward.2} parent=5 // pred_check_branch
      %170 = sbr.rel (%p167) target = $region32
    $region31: #{bn_conv_forward.2} parent=5 // pred_region
      %s171 = ssub.s32 %s11, 1
      %s172 = smul.u32 64, %s16
      %p173 = scmp.lt.s32.totalorder %s172, 127
      %s174 = scalar_select %p173, %s172, 127
      %s175 = smul.addr %s174, 4
      %s176 = scalar_lea.vmem %s0, %s175
      %p177 = pneg %p37
      %p178 = pneg %p34
      %p179 = pneg %p58
      %p180 = pneg %p55
      %p181 = pneg %p79
      %p182 = pneg %p76
      %p183 = pneg %p105
      %p184 = pneg %p102
      %s185 = smul.u32 64, %s16
      %p186 = scmp.lt.s32.totalorder %s185, 127
      %s187 = scalar_select %p186, %s185, 127
      %s188 = smul.addr %s187, 8
      %s189 = scalar_lea.vmem %s3, %s188
      %p190 = pneg %p131
      %p191 = pneg %p128
      %p192 = scmp.lt.s32.totalorder %s16, 1
      %s193 = scalar_select %p192, %s16, 1
      %s194 = smul.addr %s193, 2
      %s195 = scalar_lea.vmem %s4, %s194
      %s196 = smul.u32 64, %s16
      %p197 = scmp.lt.s32.totalorder %s196, 127
      %s198 = scalar_select %p197, %s196, 127
      %s199 = smul.addr %s198, 4
      %s200 = scalar_lea.vmem %s0, %s199
      %s201 = smul.u32 64, %s16
      %s202 = smul.u32 64, %s16
      %p203 = scmp.lt.s32.totalorder %s202, 127
      %s204 = scalar_select %p203, %s202, 127
      %s205 = smul.addr %s204, 8
      %s206 = scalar_lea.vmem %s3, %s205
      %s207 = smul.u32 64, %s16
      %p208 = scmp.lt.s32.totalorder %s16, 1
      %s209 = scalar_select %p208, %s16, 1
      %s210 = smul.addr %s209, 2
      %s211 = scalar_lea.vmem %s4, %s210
      %v213 = vld [vmem:[%s200] sm:$0xf]
      %v214 = vld [vmem:[%s200 + $0x4] sm:$0xf]
      %v215 = vld [vmem:[%s200 + $0x8] sm:$0xf]
      %v216 = vld [vmem:[%s200 + $0xc] sm:$0xf]
      %v217 = vld [vmem:[%s200 + $0x10] sm:$0xf]
      %v218 = vld [vmem:[%s200 + $0x14] sm:$0xf]
      %v219 = vld [vmem:[%s200 + $0x18] sm:$0xf]
      %v220 = vld [vmem:[%s200 + $0x1c] sm:$0xf]
      %v221 = vld [vmem:[%s200 + $0x20] sm:$0xf]
      %v222 = vld [vmem:[%s200 + $0x24] sm:$0xf]
      %v223 = vld [vmem:[%s200 + $0x28] sm:$0xf]
      %v224 = vld [vmem:[%s200 + $0x2c] sm:$0xf]
      %v225 = vld [vmem:[%s200 + $0x30] sm:$0xf]
      %v226 = vld [vmem:[%s200 + $0x34] sm:$0xf]
      %v227 = vld [vmem:[%s200 + $0x38] sm:$0xf]
      %v228 = vld [vmem:[%s200 + $0x3c] sm:$0xf]
      %v229 = vld [vmem:[%s200 + $0x40] sm:$0xf]
      %v230 = vld [vmem:[%s200 + $0x44] sm:$0xf]
      %v231 = vld [vmem:[%s200 + $0x48] sm:$0xf]
      %v232 = vld [vmem:[%s200 + $0x4c] sm:$0xf]
      %v233 = vld [vmem:[%s200 + $0x50] sm:$0xf]
      %v234 = vld [vmem:[%s200 + $0x54] sm:$0xf]
      %v235 = vld [vmem:[%s200 + $0x58] sm:$0xf]
      %v236 = vld [vmem:[%s200 + $0x5c] sm:$0xf]
      %v237 = vld [vmem:[%s200 + $0x60] sm:$0xf]
      %v238 = vld [vmem:[%s200 + $0x64] sm:$0xf]
      %v239 = vld [vmem:[%s200 + $0x68] sm:$0xf]
      %v240 = vld [vmem:[%s200 + $0x6c] sm:$0xf]
      %v241 = vld [vmem:[%s200 + $0x70] sm:$0xf]
      %v242 = vld [vmem:[%s200 + $0x74] sm:$0xf]
      %v243 = vld [vmem:[%s200 + $0x78] sm:$0xf]
      %v244 = vld [vmem:[%s200 + $0x7c] sm:$0xf]
      %v245 = vld [vmem:[%s200 + $0x80] sm:$0xf]
      %v246 = vld [vmem:[%s200 + $0x84] sm:$0xf]
      %v247 = vld [vmem:[%s200 + $0x88] sm:$0xf]
      %v248 = vld [vmem:[%s200 + $0x8c] sm:$0xf]
      %v249 = vld [vmem:[%s200 + $0x90] sm:$0xf]
      %v250 = vld [vmem:[%s200 + $0x94] sm:$0xf]
      %v251 = vld [vmem:[%s200 + $0x98] sm:$0xf]
      %v252 = vld [vmem:[%s200 + $0x9c] sm:$0xf]
      %v253 = vld [vmem:[%s200 + $0xa0] sm:$0xf]
      %v254 = vld [vmem:[%s200 + $0xa4] sm:$0xf]
      %v255 = vld [vmem:[%s200 + $0xa8] sm:$0xf]
      %v256 = vld [vmem:[%s200 + $0xac] sm:$0xf]
      %v257 = vld [vmem:[%s200 + $0xb0] sm:$0xf]
      %v258 = vld [vmem:[%s200 + $0xb4] sm:$0xf]
      %v259 = vld [vmem:[%s200 + $0xb8] sm:$0xf]
      %v260 = vld [vmem:[%s200 + $0xbc] sm:$0xf]
      %v261 = vld [vmem:[%s200 + $0xc0] sm:$0xf]
      %v262 = vld [vmem:[%s200 + $0xc4] sm:$0xf]
      %v263 = vld [vmem:[%s200 + $0xc8] sm:$0xf]
      %v264 = vld [vmem:[%s200 + $0xcc] sm:$0xf]
      %v265 = vld [vmem:[%s200 + $0xd0] sm:$0xf]
      %v266 = vld [vmem:[%s200 + $0xd4] sm:$0xf]
      %v267 = vld [vmem:[%s200 + $0xd8] sm:$0xf]
      %v268 = vld [vmem:[%s200 + $0xdc] sm:$0xf]
      %v269 = vld [vmem:[%s200 + $0xe0] sm:$0xf]
      %v270 = vld [vmem:[%s200 + $0xe4] sm:$0xf]
      %v271 = vld [vmem:[%s200 + $0xe8] sm:$0xf]
      %v272 = vld [vmem:[%s200 + $0xec] sm:$0xf]
      %v273 = vld [vmem:[%s200 + $0xf0] sm:$0xf]
      %v274 = vld [vmem:[%s200 + $0xf4] sm:$0xf]
      %v275 = vld [vmem:[%s200 + $0xf8] sm:$0xf]
      %v276 = vld [vmem:[%s200 + $0xfc] sm:$0xf]
      %v277 = vld [vmem:[%s1] sm:$0xf]
      %v278 = vld [vmem:[%s1 + $0x4] sm:$0x3]
      %v279 = vld [vmem:[%s2] sm:$0x1]
      %v281 = vlaneseq
      %v282 = vshrl.u32 %v281, 7
      %v283 = vsub.s32 0, %v282
      %v284 = vrot.slane %v279, %v283
      %v350 = vunpack.c.l.b16 %v213
      %v351 = vunpack.c.l.b16 %v214
      %v352 = vunpack.c.l.b16 %v215
      %v353 = vunpack.c.l.b16 %v216
      %v354 = vunpack.c.l.b16 %v217
      %v355 = vunpack.c.l.b16 %v218
      %v356 = vunpack.c.l.b16 %v219
      %v357 = vunpack.c.l.b16 %v220
      %v358 = vunpack.c.l.b16 %v221
      %v359 = vunpack.c.l.b16 %v222
      %v360 = vunpack.c.l.b16 %v223
      %v361 = vunpack.c.l.b16 %v224
      %v362 = vunpack.c.l.b16 %v225
      %v363 = vunpack.c.l.b16 %v226
      %v364 = vunpack.c.l.b16 %v227
      %v365 = vunpack.c.l.b16 %v228
      %v366 = vunpack.c.l.b16 %v229
      %v367 = vunpack.c.l.b16 %v230
      %v368 = vunpack.c.l.b16 %v231
      %v369 = vunpack.c.l.b16 %v232
      %v370 = vunpack.c.l.b16 %v233
      %v371 = vunpack.c.l.b16 %v234
      %v372 = vunpack.c.l.b16 %v235
      %v373 = vunpack.c.l.b16 %v236
      %v374 = vunpack.c.l.b16 %v237
      %v375 = vunpack.c.l.b16 %v238
      %v376 = vunpack.c.l.b16 %v239
      %v377 = vunpack.c.l.b16 %v240
      %v378 = vunpack.c.l.b16 %v241
      %v379 = vunpack.c.l.b16 %v242
      %v380 = vunpack.c.l.b16 %v243
      %v381 = vunpack.c.l.b16 %v244
      %v382 = vunpack.c.l.b16 %v245
      %v383 = vunpack.c.l.b16 %v246
      %v384 = vunpack.c.l.b16 %v247
      %v385 = vunpack.c.l.b16 %v248
      %v386 = vunpack.c.l.b16 %v249
      %v387 = vunpack.c.l.b16 %v250
      %v388 = vunpack.c.l.b16 %v251
      %v389 = vunpack.c.l.b16 %v252
      %v390 = vunpack.c.l.b16 %v253
      %v391 = vunpack.c.l.b16 %v254
      %v392 = vunpack.c.l.b16 %v255
      %v393 = vunpack.c.l.b16 %v256
      %v394 = vunpack.c.l.b16 %v257
      %v395 = vunpack.c.l.b16 %v258
      %v396 = vunpack.c.l.b16 %v259
      %v397 = vunpack.c.l.b16 %v260
      %v398 = vunpack.c.l.b16 %v261
      %v399 = vunpack.c.l.b16 %v262
      %v400 = vunpack.c.l.b16 %v263
      %v401 = vunpack.c.l.b16 %v264
      %v402 = vunpack.c.l.b16 %v265
      %v403 = vunpack.c.l.b16 %v266
      %v404 = vunpack.c.l.b16 %v267
      %v405 = vunpack.c.l.b16 %v268
      %v406 = vunpack.c.l.b16 %v269
      %v407 = vunpack.c.l.b16 %v270
      %v408 = vunpack.c.l.b16 %v271
      %v409 = vunpack.c.l.b16 %v272
      %v410 = vunpack.c.l.b16 %v273
      %v411 = vunpack.c.l.b16 %v274
      %v412 = vunpack.c.l.b16 %v275
      %v413 = vunpack.c.l.b16 %v276
      %v414 = vpack.c.b16 %v351, %v350
      %v415 = vpack.c.b16 %v353, %v352
      %v416 = vpack.c.b16 %v355, %v354
      %v417 = vpack.c.b16 %v357, %v356
      %v418 = vpack.c.b16 %v359, %v358
      %v419 = vpack.c.b16 %v361, %v360
      %v420 = vpack.c.b16 %v363, %v362
      %v421 = vpack.c.b16 %v365, %v364
      %v422 = vpack.c.b16 %v367, %v366
      %v423 = vpack.c.b16 %v369, %v368
      %v424 = vpack.c.b16 %v371, %v370
      %v425 = vpack.c.b16 %v373, %v372
      %v426 = vpack.c.b16 %v375, %v374
      %v427 = vpack.c.b16 %v377, %v376
      %v428 = vpack.c.b16 %v379, %v378
      %v429 = vpack.c.b16 %v381, %v380
      %v430 = vpack.c.b16 %v383, %v382
      %v431 = vpack.c.b16 %v385, %v384
      %v432 = vpack.c.b16 %v387, %v386
      %v433 = vpack.c.b16 %v389, %v388
      %v434 = vpack.c.b16 %v391, %v390
      %v435 = vpack.c.b16 %v393, %v392
      %v436 = vpack.c.b16 %v395, %v394
      %v437 = vpack.c.b16 %v397, %v396
      %v438 = vpack.c.b16 %v399, %v398
      %v439 = vpack.c.b16 %v401, %v400
      %v440 = vpack.c.b16 %v403, %v402
      %v441 = vpack.c.b16 %v405, %v404
      %v442 = vpack.c.b16 %v407, %v406
      %v443 = vpack.c.b16 %v409, %v408
      %v444 = vpack.c.b16 %v411, %v410
      %v445 = vpack.c.b16 %v413, %v412
      %v448 = vunpack.c.l.b16 %v277
      %v449 = vunpack.c.l.b16 %v278
      %v450 = vpack.c.b16 %v449, %v448
      %vm451 = vcmask 97280
      %v453 = vsel %vm451, %v414, 0
      %v456 = vsel %vm451, %v415, 0
      %v459 = vsel %vm451, %v416, 0
      %v462 = vsel %vm451, %v417, 0
      %v465 = vsel %vm451, %v418, 0
      %v468 = vsel %vm451, %v419, 0
      %v471 = vsel %vm451, %v420, 0
      %v474 = vsel %vm451, %v421, 0
      %v477 = vsel %vm451, %v422, 0
      %v480 = vsel %vm451, %v423, 0
      %v483 = vsel %vm451, %v424, 0
      %v486 = vsel %vm451, %v425, 0
      %v489 = vsel %vm451, %v426, 0
      %v492 = vsel %vm451, %v427, 0
      %v495 = vsel %vm451, %v428, 0
      %v498 = vsel %vm451, %v429, 0
      %v501 = vsel %vm451, %v430, 0
      %v504 = vsel %vm451, %v431, 0
      %v507 = vsel %vm451, %v432, 0
      %v510 = vsel %vm451, %v433, 0
      %v513 = vsel %vm451, %v434, 0
      %v516 = vsel %vm451, %v435, 0
      %v519 = vsel %vm451, %v436, 0
      %v522 = vsel %vm451, %v437, 0
      %v525 = vsel %vm451, %v438, 0
      %v528 = vsel %vm451, %v439, 0
      %v531 = vsel %vm451, %v440, 0
      %v534 = vsel %vm451, %v441, 0
      %v537 = vsel %vm451, %v442, 0
      %v540 = vsel %vm451, %v443, 0
      %v543 = vsel %vm451, %v444, 0
      %v546 = vsel %vm451, %v445, 0
      %vm548 = vcmask 1045504
      %v550 = vsel %vm548, %v450, 0
      %552 = vmatprep.subr.bf16.mxu0 0
      %553 = vmatpush1.bf16.msra.mxu0 %v550
      %554 = vmatprep.subr.bf16.mxu0 0
      %555 = vmatpush1.bf16.msra.mxu0 0
      %556 = vmatprep.subr.bf16.mxu0 0
      %557 = vmatpush1.bf16.msra.mxu0 0
      %558 = vmatprep.subr.bf16.mxu0 0
      %559 = vmatpush1.bf16.msra.mxu0 0
      %560 = vmatprep.subr.bf16.mxu0 0
      %561 = vmatpush1.bf16.msra.mxu0 0
      %562 = vmatprep.subr.bf16.mxu0 0
      %563 = vmatpush1.bf16.msra.mxu0 0
      %564 = vmatprep.subr.bf16.mxu0 0
      %565 = vmatpush1.bf16.msra.mxu0 0
      %566 = vmatprep.subr.bf16.mxu0 0
      %567 = vmatpush1.bf16.msra.mxu0 0
      %568 = vmatprep.subr.bf16.mxu0 0
      %569 = vmatpush1.bf16.msra.mxu0 0
      %570 = vmatprep.subr.bf16.mxu0 0
      %571 = vmatpush1.bf16.msra.mxu0 0
      %572 = vmatprep.subr.bf16.mxu0 0
      %573 = vmatpush1.bf16.msra.mxu0 0
      %574 = vmatprep.subr.bf16.mxu0 0
      %575 = vmatpush1.bf16.msra.mxu0 0
      %576 = vmatprep.subr.bf16.mxu0 0
      %577 = vmatpush1.bf16.msra.mxu0 0
      %578 = vmatprep.subr.bf16.mxu0 0
      %579 = vmatpush1.bf16.msra.mxu0 0
      %580 = vmatprep.subr.bf16.mxu0 0
      %581 = vmatpush1.bf16.msra.mxu0 0
      %582 = vmatprep.subr.bf16.mxu0 0
      %583 = vmatpush1.bf16.msra.mxu0 0
      %584 = vmatprep.mubr.bf16.mxu0 0
      %585 = vmatmul.mubr.bf16.gmra.mrb[0].mxu0 %v453
      %v586 = vpop.f32.mrb[0].mxu0
      %v587 = vadd.f32 %v284, %v586
      %v588 = vpop.f32.mrb[0].mxu0
      %v589 = vpop.f32.mrb[0].mxu0
      %v590 = vadd.f32 %v284, %v589
      %v591 = vpop.f32.mrb[0].mxu0
      %592 = vmatprep.mubr.bf16.mxu0 0
      %593 = vmatmul.mubr.bf16.gmra.mrb[0].mxu0 %v456
      %v594 = vpop.f32.mrb[0].mxu0
      %v595 = vadd.f32 %v284, %v594
      %v596 = vpop.f32.mrb[0].mxu0
      %v597 = vpop.f32.mrb[0].mxu0
      %v598 = vadd.f32 %v284, %v597
      %v599 = vpop.f32.mrb[0].mxu0
      %600 = vmatprep.mubr.bf16.mxu0 0
      %601 = vmatmul.mubr.bf16.gmra.mrb[0].mxu0 %v459
      %v602 = vpop.f32.mrb[0].mxu0
      %v603 = vadd.f32 %v284, %v602
      %v604 = vpop.f32.mrb[0].mxu0
      %v605 = vpop.f32.mrb[0].mxu0
      %v606 = vadd.f32 %v284, %v605
      %v607 = vpop.f32.mrb[0].mxu0
      %608 = vmatprep.mubr.bf16.mxu0 0
      %609 = vmatmul.mubr.bf16.gmra.mrb[0].mxu0 %v462
      %v610 = vpop.f32.mrb[0].mxu0
      %v611 = vadd.f32 %v284, %v610
      %v612 = vpop.f32.mrb[0].mxu0
      %v613 = vpop.f32.mrb[0].mxu0
      %v614 = vadd.f32 %v284, %v613
      %v615 = vpop.f32.mrb[0].mxu0
      %616 = vmatprep.mubr.bf16.mxu0 0
      %617 = vmatmul.mubr.bf16.gmra.mrb[0].mxu0 %v465
      %v618 = vpop.f32.mrb[0].mxu0
      %v619 = vadd.f32 %v284, %v618
      %v620 = vpop.f32.mrb[0].mxu0
      %v621 = vpop.f32.mrb[0].mxu0
      %v622 = vadd.f32 %v284, %v621
      %v623 = vpop.f32.mrb[0].mxu0
      %624 = vmatprep.mubr.bf16.mxu0 0
      %625 = vmatmul.mubr.bf16.gmra.mrb[0].mxu0 %v468
      %v626 = vpop.f32.mrb[0].mxu0
      %v627 = vadd.f32 %v284, %v626
      %v628 = vpop.f32.mrb[0].mxu0
      %v629 = vpop.f32.mrb[0].mxu0
      %v630 = vadd.f32 %v284, %v629
      %v631 = vpop.f32.mrb[0].mxu0
      %632 = vmatprep.mubr.bf16.mxu0 0
      %633 = vmatmul.mubr.bf16.gmra.mrb[0].mxu0 %v471
      %v634 = vpop.f32.mrb[0].mxu0
      %v635 = vadd.f32 %v284, %v634
      %v636 = vpop.f32.mrb[0].mxu0
      %v637 = vpop.f32.mrb[0].mxu0
      %v638 = vadd.f32 %v284, %v637
      %v639 = vpop.f32.mrb[0].mxu0
      %640 = vmatprep.mubr.bf16.mxu0 0
      %641 = vmatmul.mubr.bf16.gmra.mrb[0].mxu0 %v474
      %v642 = vpop.f32.mrb[0].mxu0
      %v643 = vadd.f32 %v284, %v642
      %v644 = vpop.f32.mrb[0].mxu0
      %v645 = vpop.f32.mrb[0].mxu0
      %v646 = vadd.f32 %v284, %v645
      %v647 = vpop.f32.mrb[0].mxu0
      %648 = vmatprep.mubr.bf16.mxu0 0
      %649 = vmatmul.mubr.bf16.gmra.mrb[0].mxu0 %v477
      %v650 = vpop.f32.mrb[0].mxu0
      %v651 = vadd.f32 %v284, %v650
      %v652 = vpop.f32.mrb[0].mxu0
      %v653 = vpop.f32.mrb[0].mxu0
      %v654 = vadd.f32 %v284, %v653
      %v655 = vpop.f32.mrb[0].mxu0
      %656 = vmatprep.mubr.bf16.mxu0 0
      %657 = vmatmul.mubr.bf16.gmra.mrb[0].mxu0 %v480
      %v658 = vpop.f32.mrb[0].mxu0
      %v659 = vadd.f32 %v284, %v658
      %v660 = vpop.f32.mrb[0].mxu0
      %v661 = vpop.f32.mrb[0].mxu0
      %v662 = vadd.f32 %v284, %v661
      %v663 = vpop.f32.mrb[0].mxu0
      %664 = vmatprep.mubr.bf16.mxu0 0
      %665 = vmatmul.mubr.bf16.gmra.mrb[0].mxu0 %v483
      %v666 = vpop.f32.mrb[0].mxu0
      %v667 = vadd.f32 %v284, %v666
      %v668 = vpop.f32.mrb[0].mxu0
      %v669 = vpop.f32.mrb[0].mxu0
      %v670 = vadd.f32 %v284, %v669
      %v671 = vpop.f32.mrb[0].mxu0
      %672 = vmatprep.mubr.bf16.mxu0 0
      %673 = vmatmul.mubr.bf16.gmra.mrb[0].mxu0 %v486
      %v674 = vpop.f32.mrb[0].mxu0
      %v675 = vadd.f32 %v284, %v674
      %v676 = vpop.f32.mrb[0].mxu0
      %v677 = vpop.f32.mrb[0].mxu0
      %v678 = vadd.f32 %v284, %v677
      %v679 = vpop.f32.mrb[0].mxu0
      %680 = vmatprep.mubr.bf16.mxu0 0
      %681 = vmatmul.mubr.bf16.gmra.mrb[0].mxu0 %v489
      %v682 = vpop.f32.mrb[0].mxu0
      %v683 = vadd.f32 %v284, %v682
      %v684 = vpop.f32.mrb[0].mxu0
      %v685 = vpop.f32.mrb[0].mxu0
      %v686 = vadd.f32 %v284, %v685
      %v687 = vpop.f32.mrb[0].mxu0
      %688 = vmatprep.mubr.bf16.mxu0 0
      %689 = vmatmul.mubr.bf16.gmra.mrb[0].mxu0 %v492
      %v690 = vpop.f32.mrb[0].mxu0
      %v691 = vadd.f32 %v284, %v690
      %v692 = vpop.f32.mrb[0].mxu0
      %v693 = vpop.f32.mrb[0].mxu0
      %v694 = vadd.f32 %v284, %v693
      %v695 = vpop.f32.mrb[0].mxu0
      %696 = vmatprep.mubr.bf16.mxu0 0
      %697 = vmatmul.mubr.bf16.gmra.mrb[0].mxu0 %v495
      %v698 = vpop.f32.mrb[0].mxu0
      %v699 = vadd.f32 %v284, %v698
      %v700 = vpop.f32.mrb[0].mxu0
      %v701 = vpop.f32.mrb[0].mxu0
      %v702 = vadd.f32 %v284, %v701
      %v703 = vpop.f32.mrb[0].mxu0
      %704 = vmatprep.mubr.bf16.mxu0 0
      %705 = vmatmul.mubr.bf16.gmra.mrb[0].mxu0 %v498
      %v706 = vpop.f32.mrb[0].mxu0
      %v707 = vadd.f32 %v284, %v706
      %v708 = vpop.f32.mrb[0].mxu0
      %v709 = vpop.f32.mrb[0].mxu0
      %v710 = vadd.f32 %v284, %v709
      %v711 = vpop.f32.mrb[0].mxu0
      %712 = vmatprep.mubr.bf16.mxu0 0
      %713 = vmatmul.mubr.bf16.gmra.mrb[0].mxu0 %v501
      %v714 = vpop.f32.mrb[0].mxu0
      %v715 = vadd.f32 %v284, %v714
      %v716 = vpop.f32.mrb[0].mxu0
      %v717 = vpop.f32.mrb[0].mxu0
      %v718 = vadd.f32 %v284, %v717
      %v719 = vpop.f32.mrb[0].mxu0
      %720 = vmatprep.mubr.bf16.mxu0 0
      %721 = vmatmul.mubr.bf16.gmra.mrb[0].mxu0 %v504
      %v722 = vpop.f32.mrb[0].mxu0
      %v723 = vadd.f32 %v284, %v722
      %v724 = vpop.f32.mrb[0].mxu0
      %v725 = vpop.f32.mrb[0].mxu0
      %v726 = vadd.f32 %v284, %v725
      %v727 = vpop.f32.mrb[0].mxu0
      %728 = vmatprep.mubr.bf16.mxu0 0
      %729 = vmatmul.mubr.bf16.gmra.mrb[0].mxu0 %v507
      %v730 = vpop.f32.mrb[0].mxu0
      %v731 = vadd.f32 %v284, %v730
      %v732 = vpop.f32.mrb[0].mxu0
      %v733 = vpop.f32.mrb[0].mxu0
      %v734 = vadd.f32 %v284, %v733
      %v735 = vpop.f32.mrb[0].mxu0
      %736 = vmatprep.mubr.bf16.mxu0 0
      %737 = vmatmul.mubr.bf16.gmra.mrb[0].mxu0 %v510
      %v738 = vpop.f32.mrb[0].mxu0
      %v739 = vadd.f32 %v284, %v738
      %v740 = vpop.f32.mrb[0].mxu0
      %v741 = vpop.f32.mrb[0].mxu0
      %v742 = vadd.f32 %v284, %v741
      %v743 = vpop.f32.mrb[0].mxu0
      %744 = vmatprep.mubr.bf16.mxu0 0
      %745 = vmatmul.mubr.bf16.gmra.mrb[0].mxu0 %v513
      %v746 = vpop.f32.mrb[0].mxu0
      %v747 = vadd.f32 %v284, %v746
      %v748 = vpop.f32.mrb[0].mxu0
      %v749 = vpop.f32.mrb[0].mxu0
      %v750 = vadd.f32 %v284, %v749
      %v751 = vpop.f32.mrb[0].mxu0
      %752 = vmatprep.mubr.bf16.mxu0 0
      %753 = vmatmul.mubr.bf16.gmra.mrb[0].mxu0 %v516
      %v754 = vpop.f32.mrb[0].mxu0
      %v755 = vadd.f32 %v284, %v754
      %v756 = vpop.f32.mrb[0].mxu0
      %v757 = vpop.f32.mrb[0].mxu0
      %v758 = vadd.f32 %v284, %v757
      %v759 = vpop.f32.mrb[0].mxu0
      %760 = vmatprep.mubr.bf16.mxu0 0
      %761 = vmatmul.mubr.bf16.gmra.mrb[0].mxu0 %v519
      %v762 = vpop.f32.mrb[0].mxu0
      %v763 = vadd.f32 %v284, %v762
      %v764 = vpop.f32.mrb[0].mxu0
      %v765 = vpop.f32.mrb[0].mxu0
      %v766 = vadd.f32 %v284, %v765
      %v767 = vpop.f32.mrb[0].mxu0
      %768 = vmatprep.mubr.bf16.mxu0 0
      %769 = vmatmul.mubr.bf16.gmra.mrb[0].mxu0 %v522
      %v770 = vpop.f32.mrb[0].mxu0
      %v771 = vadd.f32 %v284, %v770
      %v772 = vpop.f32.mrb[0].mxu0
      %v773 = vpop.f32.mrb[0].mxu0
      %v774 = vadd.f32 %v284, %v773
      %v775 = vpop.f32.mrb[0].mxu0
      %776 = vmatprep.mubr.bf16.mxu0 0
      %777 = vmatmul.mubr.bf16.gmra.mrb[0].mxu0 %v525
      %v778 = vpop.f32.mrb[0].mxu0
      %v779 = vadd.f32 %v284, %v778
      %v780 = vpop.f32.mrb[0].mxu0
      %v781 = vpop.f32.mrb[0].mxu0
      %v782 = vadd.f32 %v284, %v781
      %v783 = vpop.f32.mrb[0].mxu0
      %784 = vmatprep.mubr.bf16.mxu0 0
      %785 = vmatmul.mubr.bf16.gmra.mrb[0].mxu0 %v528
      %v786 = vpop.f32.mrb[0].mxu0
      %v787 = vadd.f32 %v284, %v786
      %v788 = vpop.f32.mrb[0].mxu0
      %v789 = vpop.f32.mrb[0].mxu0
      %v790 = vadd.f32 %v284, %v789
      %v791 = vpop.f32.mrb[0].mxu0
      %792 = vmatprep.mubr.bf16.mxu0 0
      %793 = vmatmul.mubr.bf16.gmra.mrb[0].mxu0 %v531
      %v794 = vpop.f32.mrb[0].mxu0
      %v795 = vadd.f32 %v284, %v794
      %v796 = vpop.f32.mrb[0].mxu0
      %v797 = vpop.f32.mrb[0].mxu0
      %v798 = vadd.f32 %v284, %v797
      %v799 = vpop.f32.mrb[0].mxu0
      %800 = vmatprep.mubr.bf16.mxu0 0
      %801 = vmatmul.mubr.bf16.gmra.mrb[0].mxu0 %v534
      %v802 = vpop.f32.mrb[0].mxu0
      %v803 = vadd.f32 %v284, %v802
      %v804 = vpop.f32.mrb[0].mxu0
      %v805 = vpop.f32.mrb[0].mxu0
      %v806 = vadd.f32 %v284, %v805
      %v807 = vpop.f32.mrb[0].mxu0
      %808 = vmatprep.mubr.bf16.mxu0 0
      %809 = vmatmul.mubr.bf16.gmra.mrb[0].mxu0 %v537
      %v810 = vpop.f32.mrb[0].mxu0
      %v811 = vadd.f32 %v284, %v810
      %v812 = vpop.f32.mrb[0].mxu0
      %v813 = vpop.f32.mrb[0].mxu0
      %v814 = vadd.f32 %v284, %v813
      %v815 = vpop.f32.mrb[0].mxu0
      %816 = vmatprep.mubr.bf16.mxu0 0
      %817 = vmatmul.mubr.bf16.gmra.mrb[0].mxu0 %v540
      %v818 = vpop.f32.mrb[0].mxu0
      %v819 = vadd.f32 %v284, %v818
      %v820 = vpop.f32.mrb[0].mxu0
      %v821 = vpop.f32.mrb[0].mxu0
      %v822 = vadd.f32 %v284, %v821
      %v823 = vpop.f32.mrb[0].mxu0
      %824 = vmatprep.mubr.bf16.mxu0 0
      %825 = vmatmul.mubr.bf16.gmra.mrb[0].mxu0 %v543
      %v826 = vpop.f32.mrb[0].mxu0
      %v827 = vadd.f32 %v284, %v826
      %v828 = vpop.f32.mrb[0].mxu0
      %v829 = vpop.f32.mrb[0].mxu0
      %v830 = vadd.f32 %v284, %v829
      %v831 = vpop.f32.mrb[0].mxu0
      %832 = vmatprep.mubr.bf16.mxu0 0
      %833 = vmatmul.mubr.bf16.gmra.mrb[0].mxu0 %v546
      %v834 = vpop.f32.mrb[0].mxu0
      %v835 = vadd.f32 %v284, %v834
      %v836 = vpop.f32.mrb[0].mxu0
      %v837 = vpop.f32.mrb[0].mxu0
      %v838 = vadd.f32 %v284, %v837
      %v839 = vpop.f32.mrb[0].mxu0
      %840 = vdwg.mxu0
      %841 = vst [vmem:[%s206] sm:$0xff] %v587
      %842 = vst [vmem:[%s206 + $0x8] sm:$0xff] %v590
      %843 = vst [vmem:[%s206 + $0x10] sm:$0xff] %v595
      %844 = vst [vmem:[%s206 + $0x18] sm:$0xff] %v598
      %845 = vst [vmem:[%s206 + $0x20] sm:$0xff] %v603
      %846 = vst [vmem:[%s206 + $0x28] sm:$0xff] %v606
      %847 = vst [vmem:[%s206 + $0x30] sm:$0xff] %v611
      %848 = vst [vmem:[%s206 + $0x38] sm:$0xff] %v614
      %849 = vst [vmem:[%s206 + $0x40] sm:$0xff] %v619
      %850 = vst [vmem:[%s206 + $0x48] sm:$0xff] %v622
      %851 = vst [vmem:[%s206 + $0x50] sm:$0xff] %v627
      %852 = vst [vmem:[%s206 + $0x58] sm:$0xff] %v630
      %853 = vst [vmem:[%s206 + $0x60] sm:$0xff] %v635
      %854 = vst [vmem:[%s206 + $0x68] sm:$0xff] %v638
      %855 = vst [vmem:[%s206 + $0x70] sm:$0xff] %v643
      %856 = vst [vmem:[%s206 + $0x78] sm:$0xff] %v646
      %857 = vst [vmem:[%s206 + $0x80] sm:$0xff] %v651
      %858 = vst [vmem:[%s206 + $0x88] sm:$0xff] %v654
      %859 = vst [vmem:[%s206 + $0x90] sm:$0xff] %v659
      %860 = vst [vmem:[%s206 + $0x98] sm:$0xff] %v662
      %861 = vst [vmem:[%s206 + $0xa0] sm:$0xff] %v667
      %862 = vst [vmem:[%s206 + $0xa8] sm:$0xff] %v670
      %863 = vst [vmem:[%s206 + $0xb0] sm:$0xff] %v675
      %864 = vst [vmem:[%s206 + $0xb8] sm:$0xff] %v678
      %865 = vst [vmem:[%s206 + $0xc0] sm:$0xff] %v683
      %866 = vst [vmem:[%s206 + $0xc8] sm:$0xff] %v686
      %867 = vst [vmem:[%s206 + $0xd0] sm:$0xff] %v691
      %868 = vst [vmem:[%s206 + $0xd8] sm:$0xff] %v694
      %869 = vst [vmem:[%s206 + $0xe0] sm:$0xff] %v699
      %870 = vst [vmem:[%s206 + $0xe8] sm:$0xff] %v702
      %871 = vst [vmem:[%s206 + $0xf0] sm:$0xff] %v707
      %872 = vst [vmem:[%s206 + $0xf8] sm:$0xff] %v710
      %873 = vst [vmem:[%s206 + $0x100] sm:$0xff] %v715
      %874 = vst [vmem:[%s206 + $0x108] sm:$0xff] %v718
      %875 = vst [vmem:[%s206 + $0x110] sm:$0xff] %v723
      %876 = vst [vmem:[%s206 + $0x118] sm:$0xff] %v726
      %877 = vst [vmem:[%s206 + $0x120] sm:$0xff] %v731
      %878 = vst [vmem:[%s206 + $0x128] sm:$0xff] %v734
      %879 = vst [vmem:[%s206 + $0x130] sm:$0xff] %v739
      %880 = vst [vmem:[%s206 + $0x138] sm:$0xff] %v742
      %881 = vst [vmem:[%s206 + $0x140] sm:$0xff] %v747
      %882 = vst [vmem:[%s206 + $0x148] sm:$0xff] %v750
      %883 = vst [vmem:[%s206 + $0x150] sm:$0xff] %v755
      %884 = vst [vmem:[%s206 + $0x158] sm:$0xff] %v758
      %885 = vst [vmem:[%s206 + $0x160] sm:$0xff] %v763
      %886 = vst [vmem:[%s206 + $0x168] sm:$0xff] %v766
      %887 = vst [vmem:[%s206 + $0x170] sm:$0xff] %v771
      %888 = vst [vmem:[%s206 + $0x178] sm:$0xff] %v774
      %889 = vst [vmem:[%s206 + $0x180] sm:$0xff] %v779
      %890 = vst [vmem:[%s206 + $0x188] sm:$0xff] %v782
      %891 = vst [vmem:[%s206 + $0x190] sm:$0xff] %v787
      %892 = vst [vmem:[%s206 + $0x198] sm:$0xff] %v790
      %893 = vst [vmem:[%s206 + $0x1a0] sm:$0xff] %v795
      %894 = vst [vmem:[%s206 + $0x1a8] sm:$0xff] %v798
      %895 = vst [vmem:[%s206 + $0x1b0] sm:$0xff] %v803
      %896 = vst [vmem:[%s206 + $0x1b8] sm:$0xff] %v806
      %897 = vst [vmem:[%s206 + $0x1c0] sm:$0xff] %v811
      %898 = vst [vmem:[%s206 + $0x1c8] sm:$0xff] %v814
      %899 = vst [vmem:[%s206 + $0x1d0] sm:$0xff] %v819
      %900 = vst [vmem:[%s206 + $0x1d8] sm:$0xff] %v822
      %901 = vst [vmem:[%s206 + $0x1e0] sm:$0xff] %v827
      %902 = vst [vmem:[%s206 + $0x1e8] sm:$0xff] %v830
      %903 = vst [vmem:[%s206 + $0x1f0] sm:$0xff] %v835
      %904 = vst [vmem:[%s206 + $0x1f8] sm:$0xff] %v838
      %s905 = smul.u32 %s16, 512
      %v906 = vlaneseq
      %v907 = vshrl.u32 %v906, 7
      %v908 = vadd.s32 %v907, 8
      %v909 = vadd.s32 %v907, 16
      %v910 = vadd.s32 %v907, 24
      %v911 = vadd.s32 %v907, 32
      %v912 = vadd.s32 %v907, 40
      %v913 = vadd.s32 %v907, 48
      %v914 = vadd.s32 %v907, 56
      %v915 = vadd.s32 %v907, 64
      %v916 = vadd.s32 %v907, 72
      %v917 = vadd.s32 %v907, 80
      %v918 = vadd.s32 %v907, 88
      %v919 = vadd.s32 %v907, 96
      %v920 = vadd.s32 %v907, 104
      %v921 = vadd.s32 %v907, 112
      %v922 = vadd.s32 %v907, 120
      %v923 = vadd.s32 %v907, 128
      %v924 = vadd.s32 %v907, 136
      %v925 = vadd.s32 %v907, 144
      %v926 = vadd.s32 %v907, 152
      %v927 = vadd.s32 %v907, 160
      %v928 = vadd.s32 %v907, 168
      %v929 = vadd.s32 %v907, 176
      %v930 = vadd.s32 %v907, 184
      %v931 = vadd.s32 %v907, 192
      %v932 = vadd.s32 %v907, 200
      %v933 = vadd.s32 %v907, 208
      %v934 = vadd.s32 %v907, 216
      %v935 = vadd.s32 %v907, 224
      %v936 = vadd.s32 %v907, 232
      %v937 = vadd.s32 %v907, 240
      %v938 = vadd.s32 %v907, 248
      %v939 = vadd.s32 %v907, 256
      %v940 = vadd.s32 %v907, 264
      %v941 = vadd.s32 %v907, 272
      %v942 = vadd.s32 %v907, 280
      %v943 = vadd.s32 %v907, 288
      %v944 = vadd.s32 %v907, 296
      %v945 = vadd.s32 %v907, 304
      %v946 = vadd.s32 %v907, 312
      %v947 = vadd.s32 %v907, 320
      %v948 = vadd.s32 %v907, 328
      %v949 = vadd.s32 %v907, 336
      %v950 = vadd.s32 %v907, 344
      %v951 = vadd.s32 %v907, 352
      %v952 = vadd.s32 %v907, 360
      %v953 = vadd.s32 %v907, 368
      %v954 = vadd.s32 %v907, 376
      %v955 = vadd.s32 %v907, 384
      %v956 = vadd.s32 %v907, 392
      %v957 = vadd.s32 %v907, 400
      %v958 = vadd.s32 %v907, 408
      %v959 = vadd.s32 %v907, 416
      %v960 = vadd.s32 %v907, 424
      %v961 = vadd.s32 %v907, 432
      %v962 = vadd.s32 %v907, 440
      %v963 = vadd.s32 %v907, 448
      %v964 = vadd.s32 %v907, 456
      %v965 = vadd.s32 %v907, 464
      %v966 = vadd.s32 %v907, 472
      %v967 = vadd.s32 %v907, 480
      %v968 = vadd.s32 %v907, 488
      %v969 = vadd.s32 %v907, 496
      %v970 = vadd.s32 %v907, 504
      %v971 = vstv %s905
      %v972 = vadd.s32 %v971, %v907
      %v973 = vadd.s32 %v971, %v908
      %v974 = vadd.s32 %v971, %v909
      %v975 = vadd.s32 %v971, %v910
      %v976 = vadd.s32 %v971, %v911
      %v977 = vadd.s32 %v971, %v912
      %v978 = vadd.s32 %v971, %v913
      %v979 = vadd.s32 %v971, %v914
      %v980 = vadd.s32 %v971, %v915
      %v981 = vadd.s32 %v971, %v916
      %v982 = vadd.s32 %v971, %v917
      %v983 = vadd.s32 %v971, %v918
      %v984 = vadd.s32 %v971, %v919
      %v985 = vadd.s32 %v971, %v920
      %v986 = vadd.s32 %v971, %v921
      %v987 = vadd.s32 %v971, %v922
      %v988 = vadd.s32 %v971, %v923
      %v989 = vadd.s32 %v971, %v924
      %v990 = vadd.s32 %v971, %v925
      %v991 = vadd.s32 %v971, %v926
      %v992 = vadd.s32 %v971, %v927
      %v993 = vadd.s32 %v971, %v928
      %v994 = vadd.s32 %v971, %v929
      %v995 = vadd.s32 %v971, %v930
      %v996 = vadd.s32 %v971, %v931
      %v997 = vadd.s32 %v971, %v932
      %v998 = vadd.s32 %v971, %v933
      %v999 = vadd.s32 %v971, %v934
      %v1000 = vadd.s32 %v971, %v935
      %v1001 = vadd.s32 %v971, %v936
      %v1002 = vadd.s32 %v971, %v937
      %v1003 = vadd.s32 %v971, %v938
      %v1004 = vadd.s32 %v971, %v939
      %v1005 = vadd.s32 %v971, %v940
      %v1006 = vadd.s32 %v971, %v941
      %v1007 = vadd.s32 %v971, %v942
      %v1008 = vadd.s32 %v971, %v943
      %v1009 = vadd.s32 %v971, %v944
      %v1010 = vadd.s32 %v971, %v945
      %v1011 = vadd.s32 %v971, %v946
      %v1012 = vadd.s32 %v971, %v947
      %v1013 = vadd.s32 %v971, %v948
      %v1014 = vadd.s32 %v971, %v949
      %v1015 = vadd.s32 %v971, %v950
      %v1016 = vadd.s32 %v971, %v951
      %v1017 = vadd.s32 %v971, %v952
      %v1018 = vadd.s32 %v971, %v953
      %v1019 = vadd.s32 %v971, %v954
      %v1020 = vadd.s32 %v971, %v955
      %v1021 = vadd.s32 %v971, %v956
      %v1022 = vadd.s32 %v971, %v957
      %v1023 = vadd.s32 %v971, %v958
      %v1024 = vadd.s32 %v971, %v959
      %v1025 = vadd.s32 %v971, %v960
      %v1026 = vadd.s32 %v971, %v961
      %v1027 = vadd.s32 %v971, %v962
      %v1028 = vadd.s32 %v971, %v963
      %v1029 = vadd.s32 %v971, %v964
      %v1030 = vadd.s32 %v971, %v965
      %v1031 = vadd.s32 %v971, %v966
      %v1032 = vadd.s32 %v971, %v967
      %v1033 = vadd.s32 %v971, %v968
      %v1034 = vadd.s32 %v971, %v969
      %v1035 = vadd.s32 %v971, %v970
      %vm1036 = vcmp.lt.s32.totalorder %v972, 640
      %vm1037 = vcmp.lt.s32.totalorder %v973, 640
      %vm1038 = vcmp.lt.s32.totalorder %v974, 640
      %vm1039 = vcmp.lt.s32.totalorder %v975, 640
      %vm1040 = vcmp.lt.s32.totalorder %v976, 640
      %vm1041 = vcmp.lt.s32.totalorder %v977, 640
      %vm1042 = vcmp.lt.s32.totalorder %v978, 640
      %vm1043 = vcmp.lt.s32.totalorder %v979, 640
      %vm1044 = vcmp.lt.s32.totalorder %v980, 640
      %vm1045 = vcmp.lt.s32.totalorder %v981, 640
      %vm1046 = vcmp.lt.s32.totalorder %v982, 640
      %vm1047 = vcmp.lt.s32.totalorder %v983, 640
      %vm1048 = vcmp.lt.s32.totalorder %v984, 640
      %vm1049 = vcmp.lt.s32.totalorder %v985, 640
      %vm1050 = vcmp.lt.s32.totalorder %v986, 640
      %vm1051 = vcmp.lt.s32.totalorder %v987, 640
      %vm1052 = vcmp.lt.s32.totalorder %v988, 640
      %vm1053 = vcmp.lt.s32.totalorder %v989, 640
      %vm1054 = vcmp.lt.s32.totalorder %v990, 640
      %vm1055 = vcmp.lt.s32.totalorder %v991, 640
      %vm1056 = vcmp.lt.s32.totalorder %v992, 640
      %vm1057 = vcmp.lt.s32.totalorder %v993, 640
      %vm1058 = vcmp.lt.s32.totalorder %v994, 640
      %vm1059 = vcmp.lt.s32.totalorder %v995, 640
      %vm1060 = vcmp.lt.s32.totalorder %v996, 640
      %vm1061 = vcmp.lt.s32.totalorder %v997, 640
      %vm1062 = vcmp.lt.s32.totalorder %v998, 640
      %vm1063 = vcmp.lt.s32.totalorder %v999, 640
      %vm1064 = vcmp.lt.s32.totalorder %v1000, 640
      %vm1065 = vcmp.lt.s32.totalorder %v1001, 640
      %vm1066 = vcmp.lt.s32.totalorder %v1002, 640
      %vm1067 = vcmp.lt.s32.totalorder %v1003, 640
      %vm1068 = vcmp.lt.s32.totalorder %v1004, 640
      %vm1069 = vcmp.lt.s32.totalorder %v1005, 640
      %vm1070 = vcmp.lt.s32.totalorder %v1006, 640
      %vm1071 = vcmp.lt.s32.totalorder %v1007, 640
      %vm1072 = vcmp.lt.s32.totalorder %v1008, 640
      %vm1073 = vcmp.lt.s32.totalorder %v1009, 640
      %vm1074 = vcmp.lt.s32.totalorder %v1010, 640
      %vm1075 = vcmp.lt.s32.totalorder %v1011, 640
      %vm1076 = vcmp.lt.s32.totalorder %v1012, 640
      %vm1077 = vcmp.lt.s32.totalorder %v1013, 640
      %vm1078 = vcmp.lt.s32.totalorder %v1014, 640
      %vm1079 = vcmp.lt.s32.totalorder %v1015, 640
      %vm1080 = vcmp.lt.s32.totalorder %v1016, 640
      %vm1081 = vcmp.lt.s32.totalorder %v1017, 640
      %vm1082 = vcmp.lt.s32.totalorder %v1018, 640
      %vm1083 = vcmp.lt.s32.totalorder %v1019, 640
      %vm1084 = vcmp.lt.s32.totalorder %v1020, 640
      %vm1085 = vcmp.lt.s32.totalorder %v1021, 640
      %vm1086 = vcmp.lt.s32.totalorder %v1022, 640
      %vm1087 = vcmp.lt.s32.totalorder %v1023, 640
      %vm1088 = vcmp.lt.s32.totalorder %v1024, 640
      %vm1089 = vcmp.lt.s32.totalorder %v1025, 640
      %vm1090 = vcmp.lt.s32.totalorder %v1026, 640
      %vm1091 = vcmp.lt.s32.totalorder %v1027, 640
      %vm1092 = vcmp.lt.s32.totalorder %v1028, 640
      %vm1093 = vcmp.lt.s32.totalorder %v1029, 640
      %vm1094 = vcmp.lt.s32.totalorder %v1030, 640
      %vm1095 = vcmp.lt.s32.totalorder %v1031, 640
      %vm1096 = vcmp.lt.s32.totalorder %v1032, 640
      %vm1097 = vcmp.lt.s32.totalorder %v1033, 640
      %vm1098 = vcmp.lt.s32.totalorder %v1034, 640
      %vm1099 = vcmp.lt.s32.totalorder %v1035, 640
      %v1100 = vsel %vm1036, 1, 0
      %v1101 = vsel %vm1037, 1, 0
      %v1102 = vsel %vm1038, 1, 0
      %v1103 = vsel %vm1039, 1, 0
      %v1104 = vsel %vm1040, 1, 0
      %v1105 = vsel %vm1041, 1, 0
      %v1106 = vsel %vm1042, 1, 0
      %v1107 = vsel %vm1043, 1, 0
      %v1108 = vsel %vm1044, 1, 0
      %v1109 = vsel %vm1045, 1, 0
      %v1110 = vsel %vm1046, 1, 0
      %v1111 = vsel %vm1047, 1, 0
      %v1112 = vsel %vm1048, 1, 0
      %v1113 = vsel %vm1049, 1, 0
      %v1114 = vsel %vm1050, 1, 0
      %v1115 = vsel %vm1051, 1, 0
      %v1116 = vsel %vm1052, 1, 0
      %v1117 = vsel %vm1053, 1, 0
      %v1118 = vsel %vm1054, 1, 0
      %v1119 = vsel %vm1055, 1, 0
      %v1120 = vsel %vm1056, 1, 0
      %v1121 = vsel %vm1057, 1, 0
      %v1122 = vsel %vm1058, 1, 0
      %v1123 = vsel %vm1059, 1, 0
      %v1124 = vsel %vm1060, 1, 0
      %v1125 = vsel %vm1061, 1, 0
      %v1126 = vsel %vm1062, 1, 0
      %v1127 = vsel %vm1063, 1, 0
      %v1128 = vsel %vm1064, 1, 0
      %v1129 = vsel %vm1065, 1, 0
      %v1130 = vsel %vm1066, 1, 0
      %v1131 = vsel %vm1067, 1, 0
      %v1132 = vsel %vm1068, 1, 0
      %v1133 = vsel %vm1069, 1, 0
      %v1134 = vsel %vm1070, 1, 0
      %v1135 = vsel %vm1071, 1, 0
      %v1136 = vsel %vm1072, 1, 0
      %v1137 = vsel %vm1073, 1, 0
      %v1138 = vsel %vm1074, 1, 0
      %v1139 = vsel %vm1075, 1, 0
      %v1140 = vsel %vm1076, 1, 0
      %v1141 = vsel %vm1077, 1, 0
      %v1142 = vsel %vm1078, 1, 0
      %v1143 = vsel %vm1079, 1, 0
      %v1144 = vsel %vm1080, 1, 0
      %v1145 = vsel %vm1081, 1, 0
      %v1146 = vsel %vm1082, 1, 0
      %v1147 = vsel %vm1083, 1, 0
      %v1148 = vsel %vm1084, 1, 0
      %v1149 = vsel %vm1085, 1, 0
      %v1150 = vsel %vm1086, 1, 0
      %v1151 = vsel %vm1087, 1, 0
      %v1152 = vsel %vm1088, 1, 0
      %v1153 = vsel %vm1089, 1, 0
      %v1154 = vsel %vm1090, 1, 0
      %v1155 = vsel %vm1091, 1, 0
      %v1156 = vsel %vm1092, 1, 0
      %v1157 = vsel %vm1093, 1, 0
      %v1158 = vsel %vm1094, 1, 0
      %v1159 = vsel %vm1095, 1, 0
      %v1160 = vsel %vm1096, 1, 0
      %v1161 = vsel %vm1097, 1, 0
      %v1162 = vsel %vm1098, 1, 0
      %v1163 = vsel %vm1099, 1, 0
      %vm1164 = vcmp.eq.s32.totalorder %v1100, 1
      %vm1165 = vcmp.eq.s32.totalorder %v1101, 1
      %vm1166 = vcmp.eq.s32.totalorder %v1102, 1
      %vm1167 = vcmp.eq.s32.totalorder %v1103, 1
      %vm1168 = vcmp.eq.s32.totalorder %v1104, 1
      %vm1169 = vcmp.eq.s32.totalorder %v1105, 1
      %vm1170 = vcmp.eq.s32.totalorder %v1106, 1
      %vm1171 = vcmp.eq.s32.totalorder %v1107, 1
      %vm1172 = vcmp.eq.s32.totalorder %v1108, 1
      %vm1173 = vcmp.eq.s32.totalorder %v1109, 1
      %vm1174 = vcmp.eq.s32.totalorder %v1110, 1
      %vm1175 = vcmp.eq.s32.totalorder %v1111, 1
      %vm1176 = vcmp.eq.s32.totalorder %v1112, 1
      %vm1177 = vcmp.eq.s32.totalorder %v1113, 1
      %vm1178 = vcmp.eq.s32.totalorder %v1114, 1
      %vm1179 = vcmp.eq.s32.totalorder %v1115, 1
      %vm1180 = vcmp.eq.s32.totalorder %v1116, 1
      %vm1181 = vcmp.eq.s32.totalorder %v1117, 1
      %vm1182 = vcmp.eq.s32.totalorder %v1118, 1
      %vm1183 = vcmp.eq.s32.totalorder %v1119, 1
      %vm1184 = vcmp.eq.s32.totalorder %v1120, 1
      %vm1185 = vcmp.eq.s32.totalorder %v1121, 1
      %vm1186 = vcmp.eq.s32.totalorder %v1122, 1
      %vm1187 = vcmp.eq.s32.totalorder %v1123, 1
      %vm1188 = vcmp.eq.s32.totalorder %v1124, 1
      %vm1189 = vcmp.eq.s32.totalorder %v1125, 1
      %vm1190 = vcmp.eq.s32.totalorder %v1126, 1
      %vm1191 = vcmp.eq.s32.totalorder %v1127, 1
      %vm1192 = vcmp.eq.s32.totalorder %v1128, 1
      %vm1193 = vcmp.eq.s32.totalorder %v1129, 1
      %vm1194 = vcmp.eq.s32.totalorder %v1130, 1
      %vm1195 = vcmp.eq.s32.totalorder %v1131, 1
      %vm1196 = vcmp.eq.s32.totalorder %v1132, 1
      %vm1197 = vcmp.eq.s32.totalorder %v1133, 1
      %vm1198 = vcmp.eq.s32.totalorder %v1134, 1
      %vm1199 = vcmp.eq.s32.totalorder %v1135, 1
      %vm1200 = vcmp.eq.s32.totalorder %v1136, 1
      %vm1201 = vcmp.eq.s32.totalorder %v1137, 1
      %vm1202 = vcmp.eq.s32.totalorder %v1138, 1
      %vm1203 = vcmp.eq.s32.totalorder %v1139, 1
      %vm1204 = vcmp.eq.s32.totalorder %v1140, 1
      %vm1205 = vcmp.eq.s32.totalorder %v1141, 1
      %vm1206 = vcmp.eq.s32.totalorder %v1142, 1
      %vm1207 = vcmp.eq.s32.totalorder %v1143, 1
      %vm1208 = vcmp.eq.s32.totalorder %v1144, 1
      %vm1209 = vcmp.eq.s32.totalorder %v1145, 1
      %vm1210 = vcmp.eq.s32.totalorder %v1146, 1
      %vm1211 = vcmp.eq.s32.totalorder %v1147, 1
      %vm1212 = vcmp.eq.s32.totalorder %v1148, 1
      %vm1213 = vcmp.eq.s32.totalorder %v1149, 1
      %vm1214 = vcmp.eq.s32.totalorder %v1150, 1
      %vm1215 = vcmp.eq.s32.totalorder %v1151, 1
      %vm1216 = vcmp.eq.s32.totalorder %v1152, 1
      %vm1217 = vcmp.eq.s32.totalorder %v1153, 1
      %vm1218 = vcmp.eq.s32.totalorder %v1154, 1
      %vm1219 = vcmp.eq.s32.totalorder %v1155, 1
      %vm1220 = vcmp.eq.s32.totalorder %v1156, 1
      %vm1221 = vcmp.eq.s32.totalorder %v1157, 1
      %vm1222 = vcmp.eq.s32.totalorder %v1158, 1
      %vm1223 = vcmp.eq.s32.totalorder %v1159, 1
      %vm1224 = vcmp.eq.s32.totalorder %v1160, 1
      %vm1225 = vcmp.eq.s32.totalorder %v1161, 1
      %vm1226 = vcmp.eq.s32.totalorder %v1162, 1
      %vm1227 = vcmp.eq.s32.totalorder %v1163, 1
      %v1228 = vsel %vm1164, %v587, 0.0
      %v1229 = vsel %vm1165, %v590, 0.0
      %v1230 = vsel %vm1166, %v595, 0.0
      %v1231 = vsel %vm1167, %v598, 0.0
      %v1232 = vsel %vm1168, %v603, 0.0
      %v1233 = vsel %vm1169, %v606, 0.0
      %v1234 = vsel %vm1170, %v611, 0.0
      %v1235 = vsel %vm1171, %v614, 0.0
      %v1236 = vsel %vm1172, %v619, 0.0
      %v1237 = vsel %vm1173, %v622, 0.0
      %v1238 = vsel %vm1174, %v627, 0.0
      %v1239 = vsel %vm1175, %v630, 0.0
      %v1240 = vsel %vm1176, %v635, 0.0
      %v1241 = vsel %vm1177, %v638, 0.0
      %v1242 = vsel %vm1178, %v643, 0.0
      %v1243 = vsel %vm1179, %v646, 0.0
      %v1244 = vsel %vm1180, %v651, 0.0
      %v1245 = vsel %vm1181, %v654, 0.0
      %v1246 = vsel %vm1182, %v659, 0.0
      %v1247 = vsel %vm1183, %v662, 0.0
      %v1248 = vsel %vm1184, %v667, 0.0
      %v1249 = vsel %vm1185, %v670, 0.0
      %v1250 = vsel %vm1186, %v675, 0.0
      %v1251 = vsel %vm1187, %v678, 0.0
      %v1252 = vsel %vm1188, %v683, 0.0
      %v1253 = vsel %vm1189, %v686, 0.0
      %v1254 = vsel %vm1190, %v691, 0.0
      %v1255 = vsel %vm1191, %v694, 0.0
      %v1256 = vsel %vm1192, %v699, 0.0
      %v1257 = vsel %vm1193, %v702, 0.0
      %v1258 = vsel %vm1194, %v707, 0.0
      %v1259 = vsel %vm1195, %v710, 0.0
      %v1260 = vsel %vm1196, %v715, 0.0
      %v1261 = vsel %vm1197, %v718, 0.0
      %v1262 = vsel %vm1198, %v723, 0.0
      %v1263 = vsel %vm1199, %v726, 0.0
      %v1264 = vsel %vm1200, %v731, 0.0
      %v1265 = vsel %vm1201, %v734, 0.0
      %v1266 = vsel %vm1202, %v739, 0.0
      %v1267 = vsel %vm1203, %v742, 0.0
      %v1268 = vsel %vm1204, %v747, 0.0
      %v1269 = vsel %vm1205, %v750, 0.0
      %v1270 = vsel %vm1206, %v755, 0.0
      %v1271 = vsel %vm1207, %v758, 0.0
      %v1272 = vsel %vm1208, %v763, 0.0
      %v1273 = vsel %vm1209, %v766, 0.0
      %v1274 = vsel %vm1210, %v771, 0.0
      %v1275 = vsel %vm1211, %v774, 0.0
      %v1276 = vsel %vm1212, %v779, 0.0
      %v1277 = vsel %vm1213, %v782, 0.0
      %v1278 = vsel %vm1214, %v787, 0.0
      %v1279 = vsel %vm1215, %v790, 0.0
      %v1280 = vsel %vm1216, %v795, 0.0
      %v1281 = vsel %vm1217, %v798, 0.0
      %v1282 = vsel %vm1218, %v803, 0.0
      %v1283 = vsel %vm1219, %v806, 0.0
      %v1284 = vsel %vm1220, %v811, 0.0
      %v1285 = vsel %vm1221, %v814, 0.0
      %v1286 = vsel %vm1222, %v819, 0.0
      %v1287 = vsel %vm1223, %v822, 0.0
      %v1288 = vsel %vm1224, %v827, 0.0
      %v1289 = vsel %vm1225, %v830, 0.0
      %v1290 = vsel %vm1226, %v835, 0.0
      %v1291 = vsel %vm1227, %v838, 0.0
      %v1292 = vadd.f32 %v1228, %v1229
      %v1293 = vadd.f32 %v1292, %v1230
      %v1294 = vadd.f32 %v1293, %v1231
      %v1295 = vadd.f32 %v1294, %v1232
      %v1296 = vadd.f32 %v1295, %v1233
      %v1297 = vadd.f32 %v1296, %v1234
      %v1298 = vadd.f32 %v1297, %v1235
      %v1299 = vadd.f32 %v1298, %v1236
      %v1300 = vadd.f32 %v1299, %v1237
      %v1301 = vadd.f32 %v1300, %v1238
      %v1302 = vadd.f32 %v1301, %v1239
      %v1303 = vadd.f32 %v1302, %v1240
      %v1304 = vadd.f32 %v1303, %v1241
      %v1305 = vadd.f32 %v1304, %v1242
      %v1306 = vadd.f32 %v1305, %v1243
      %v1307 = vadd.f32 %v1306, %v1244
      %v1308 = vadd.f32 %v1307, %v1245
      %v1309 = vadd.f32 %v1308, %v1246
      %v1310 = vadd.f32 %v1309, %v1247
      %v1311 = vadd.f32 %v1310, %v1248
      %v1312 = vadd.f32 %v1311, %v1249
      %v1313 = vadd.f32 %v1312, %v1250
      %v1314 = vadd.f32 %v1313, %v1251
      %v1315 = vadd.f32 %v1314, %v1252
      %v1316 = vadd.f32 %v1315, %v1253
      %v1317 = vadd.f32 %v1316, %v1254
      %v1318 = vadd.f32 %v1317, %v1255
      %v1319 = vadd.f32 %v1318, %v1256
      %v1320 = vadd.f32 %v1319, %v1257
      %v1321 = vadd.f32 %v1320, %v1258
      %v1322 = vadd.f32 %v1321, %v1259
      %v1323 = vadd.f32 %v1322, %v1260
      %v1324 = vadd.f32 %v1323, %v1261
      %v1325 = vadd.f32 %v1324, %v1262
      %v1326 = vadd.f32 %v1325, %v1263
      %v1327 = vadd.f32 %v1326, %v1264
      %v1328 = vadd.f32 %v1327, %v1265
      %v1329 = vadd.f32 %v1328, %v1266
      %v1330 = vadd.f32 %v1329, %v1267
      %v1331 = vadd.f32 %v1330, %v1268
      %v1332 = vadd.f32 %v1331, %v1269
      %v1333 = vadd.f32 %v1332, %v1270
      %v1334 = vadd.f32 %v1333, %v1271
      %v1335 = vadd.f32 %v1334, %v1272
      %v1336 = vadd.f32 %v1335, %v1273
      %v1337 = vadd.f32 %v1336, %v1274
      %v1338 = vadd.f32 %v1337, %v1275
      %v1339 = vadd.f32 %v1338, %v1276
      %v1340 = vadd.f32 %v1339, %v1277
      %v1341 = vadd.f32 %v1340, %v1278
      %v1342 = vadd.f32 %v1341, %v1279
      %v1343 = vadd.f32 %v1342, %v1280
      %v1344 = vadd.f32 %v1343, %v1281
      %v1345 = vadd.f32 %v1344, %v1282
      %v1346 = vadd.f32 %v1345, %v1283
      %v1347 = vadd.f32 %v1346, %v1284
      %v1348 = vadd.f32 %v1347, %v1285
      %v1349 = vadd.f32 %v1348, %v1286
      %v1350 = vadd.f32 %v1349, %v1287
      %v1351 = vadd.f32 %v1350, %v1288
      %v1352 = vadd.f32 %v1351, %v1289
      %v1353 = vadd.f32 %v1352, %v1290
      %v1354 = vadd.f32 %v1353, %v1291
      %v1355 = vrot.slane %v1354, 4
      %v1356 = vadd.f32 %v1354, %v1355
      %v1357 = vrot.slane %v1356, 2
      %v1358 = vadd.f32 %v1356, %v1357
      %v1359 = vrot.slane %v1358, 1
      %v1360 = vadd.f32 %v1358, %v1359
      %v1361 = vmul.f32 %v1228, %v587
      %v1362 = vmul.f32 %v1229, %v590
      %v1363 = vmul.f32 %v1230, %v595
      %v1364 = vmul.f32 %v1231, %v598
      %v1365 = vmul.f32 %v1232, %v603
      %v1366 = vmul.f32 %v1233, %v606
      %v1367 = vmul.f32 %v1234, %v611
      %v1368 = vmul.f32 %v1235, %v614
      %v1369 = vmul.f32 %v1236, %v619
      %v1370 = vmul.f32 %v1237, %v622
      %v1371 = vmul.f32 %v1238, %v627
      %v1372 = vmul.f32 %v1239, %v630
      %v1373 = vmul.f32 %v1240, %v635
      %v1374 = vmul.f32 %v1241, %v638
      %v1375 = vmul.f32 %v1242, %v643
      %v1376 = vmul.f32 %v1243, %v646
      %v1377 = vmul.f32 %v1244, %v651
      %v1378 = vmul.f32 %v1245, %v654
      %v1379 = vmul.f32 %v1246, %v659
      %v1380 = vmul.f32 %v1247, %v662
      %v1381 = vmul.f32 %v1248, %v667
      %v1382 = vmul.f32 %v1249, %v670
      %v1383 = vmul.f32 %v1250, %v675
      %v1384 = vmul.f32 %v1251, %v678
      %v1385 = vmul.f32 %v1252, %v683
      %v1386 = vmul.f32 %v1253, %v686
      %v1387 = vmul.f32 %v1254, %v691
      %v1388 = vmul.f32 %v1255, %v694
      %v1389 = vmul.f32 %v1256, %v699
      %v1390 = vmul.f32 %v1257, %v702
      %v1391 = vmul.f32 %v1258, %v707
      %v1392 = vmul.f32 %v1259, %v710
      %v1393 = vmul.f32 %v1260, %v715
      %v1394 = vmul.f32 %v1261, %v718
      %v1395 = vmul.f32 %v1262, %v723
      %v1396 = vmul.f32 %v1263, %v726
      %v1397 = vmul.f32 %v1264, %v731
      %v1398 = vmul.f32 %v1265, %v734
      %v1399 = vmul.f32 %v1266, %v739
      %v1400 = vmul.f32 %v1267, %v742
      %v1401 = vmul.f32 %v1268, %v747
      %v1402 = vmul.f32 %v1269, %v750
      %v1403 = vmul.f32 %v1270, %v755
      %v1404 = vmul.f32 %v1271, %v758
      %v1405 = vmul.f32 %v1272, %v763
      %v1406 = vmul.f32 %v1273, %v766
      %v1407 = vmul.f32 %v1274, %v771
      %v1408 = vmul.f32 %v1275, %v774
      %v1409 = vmul.f32 %v1276, %v779
      %v1410 = vmul.f32 %v1277, %v782
      %v1411 = vmul.f32 %v1278, %v787
      %v1412 = vmul.f32 %v1279, %v790
      %v1413 = vmul.f32 %v1280, %v795
      %v1414 = vmul.f32 %v1281, %v798
      %v1415 = vmul.f32 %v1282, %v803
      %v1416 = vmul.f32 %v1283, %v806
      %v1417 = vmul.f32 %v1284, %v811
      %v1418 = vmul.f32 %v1285, %v814
      %v1419 = vmul.f32 %v1286, %v819
      %v1420 = vmul.f32 %v1287, %v822
      %v1421 = vmul.f32 %v1288, %v827
      %v1422 = vmul.f32 %v1289, %v830
      %v1423 = vmul.f32 %v1290, %v835
      %v1424 = vmul.f32 %v1291, %v838
      %v1425 = vadd.f32 %v1361, %v1362
      %v1426 = vadd.f32 %v1425, %v1363
      %v1427 = vadd.f32 %v1426, %v1364
      %v1428 = vadd.f32 %v1427, %v1365
      %v1429 = vadd.f32 %v1428, %v1366
      %v1430 = vadd.f32 %v1429, %v1367
      %v1431 = vadd.f32 %v1430, %v1368
      %v1432 = vadd.f32 %v1431, %v1369
      %v1433 = vadd.f32 %v1432, %v1370
      %v1434 = vadd.f32 %v1433, %v1371
      %v1435 = vadd.f32 %v1434, %v1372
      %v1436 = vadd.f32 %v1435, %v1373
      %v1437 = vadd.f32 %v1436, %v1374
      %v1438 = vadd.f32 %v1437, %v1375
      %v1439 = vadd.f32 %v1438, %v1376
      %v1440 = vadd.f32 %v1439, %v1377
      %v1441 = vadd.f32 %v1440, %v1378
      %v1442 = vadd.f32 %v1441, %v1379
      %v1443 = vadd.f32 %v1442, %v1380
      %v1444 = vadd.f32 %v1443, %v1381
      %v1445 = vadd.f32 %v1444, %v1382
      %v1446 = vadd.f32 %v1445, %v1383
      %v1447 = vadd.f32 %v1446, %v1384
      %v1448 = vadd.f32 %v1447, %v1385
      %v1449 = vadd.f32 %v1448, %v1386
      %v1450 = vadd.f32 %v1449, %v1387
      %v1451 = vadd.f32 %v1450, %v1388
      %v1452 = vadd.f32 %v1451, %v1389
      %v1453 = vadd.f32 %v1452, %v1390
      %v1454 = vadd.f32 %v1453, %v1391
      %v1455 = vadd.f32 %v1454, %v1392
      %v1456 = vadd.f32 %v1455, %v1393
      %v1457 = vadd.f32 %v1456, %v1394
      %v1458 = vadd.f32 %v1457, %v1395
      %v1459 = vadd.f32 %v1458, %v1396
      %v1460 = vadd.f32 %v1459, %v1397
      %v1461 = vadd.f32 %v1460, %v1398
      %v1462 = vadd.f32 %v1461, %v1399
      %v1463 = vadd.f32 %v1462, %v1400
      %v1464 = vadd.f32 %v1463, %v1401
      %v1465 = vadd.f32 %v1464, %v1402
      %v1466 = vadd.f32 %v1465, %v1403
      %v1467 = vadd.f32 %v1466, %v1404
      %v1468 = vadd.f32 %v1467, %v1405
      %v1469 = vadd.f32 %v1468, %v1406
      %v1470 = vadd.f32 %v1469, %v1407
      %v1471 = vadd.f32 %v1470, %v1408
      %v1472 = vadd.f32 %v1471, %v1409
      %v1473 = vadd.f32 %v1472, %v1410
      %v1474 = vadd.f32 %v1473, %v1411
      %v1475 = vadd.f32 %v1474, %v1412
      %v1476 = vadd.f32 %v1475, %v1413
      %v1477 = vadd.f32 %v1476, %v1414
      %v1478 = vadd.f32 %v1477, %v1415
      %v1479 = vadd.f32 %v1478, %v1416
      %v1480 = vadd.f32 %v1479, %v1417
      %v1481 = vadd.f32 %v1480, %v1418
      %v1482 = vadd.f32 %v1481, %v1419
      %v1483 = vadd.f32 %v1482, %v1420
      %v1484 = vadd.f32 %v1483, %v1421
      %v1485 = vadd.f32 %v1484, %v1422
      %v1486 = vadd.f32 %v1485, %v1423
      %v1487 = vadd.f32 %v1486, %v1424
      %v1488 = vrot.slane %v1487, 4
      %v1489 = vadd.f32 %v1487, %v1488
      %v1490 = vrot.slane %v1489, 2
      %v1491 = vadd.f32 %v1489, %v1490
      %v1492 = vrot.slane %v1491, 1
      %v1493 = vadd.f32 %v1491, %v1492
      %vm1494 = vcmask 1040384
      %v1495 = vsel %vm1494, %v1360, %v1493
      %1496 = vst [vmem:[%s211] sm:$0x3] %v1495
      %s1497 = smul.u32 64, %s16
      %p1498 = scmp.lt.s32.totalorder %s1497, 127
      %s1499 = scalar_select %p1498, %s1497, 127
      %s1500 = smul.addr %s1499, 8
      %s1501 = scalar_lea.vmem %s3, %s1500
      %p1502 = scmp.lt.s32.totalorder %s16, 1
      %s1503 = scalar_select %p1502, %s16, 1
      %s1504 = smul.addr %s1503, 2
      %s1505 = scalar_lea.vmem %s4, %s1504
      // Predicated region
      $region33: #{bn_conv_forward.2} parent=31 // pred_check
        %p1506 = pneg %p102
      $region34: #{bn_conv_forward.2} parent=31 // pred_check_branch
        %1508 = sbr.rel (%p1506) target = $region36
      $region35: #{bn_conv_forward.2} parent=31 // pred_region
        %s1509 = smul.u32 64, %s16
      $region36: #{bn_conv_forward.2} parent=31 // pred_fallthru
        _
      // Predicated region
      $region37: #{bn_conv_forward.2} parent=31 // pred_check
        %p1510 = pneg %p128
      $region38: #{bn_conv_forward.2} parent=31 // pred_check_branch
        %1512 = sbr.rel (%p1510) target = $region40
      $region39: #{bn_conv_forward.2} parent=31 // pred_region
        _
      $region40: #{bn_conv_forward.2} parent=31 // pred_fallthru
        _
    $region32: #{bn_conv_forward.2} parent=5 // pred_fallthru
      _
    %p1513 = scmp.le.s32.totalorder 2, %s11
    // Predicated region
    $region41: #{bn_conv_forward.2} parent=5 // pred_check
      %p1514 = pneg %p1513
    $region42: #{bn_conv_forward.2} parent=5 // pred_check_branch
      %1516 = sbr.rel (%p1514) target = $region44
    $region43: #{bn_conv_forward.2} parent=5 // pred_region
      %s1517 = ssub.s32 %s11, 2
      // Predicated region
      $region45: #{bn_conv_forward.2} parent=43 // pred_check
        %p1518 = pneg %p108
      $region46: #{bn_conv_forward.2} parent=43 // pred_check_branch
        %1520 = sbr.rel (%p1518) target = $region48
      $region47: #{bn_conv_forward.2} parent=43 // pred_region
        %s1521 = smul.u32 64, %s17
        %p1522 = scmp.lt.s32.totalorder %s1521, 127
        %s1523 = scalar_select %p1522, %s1521, 127
        %s1524 = smul.addr %s1523, 8
        %s1525 = scalar_lea.vmem %s3, %s1524
      $region48: #{bn_conv_forward.2} parent=43 // pred_fallthru
        _
      // Predicated region
      $region49: #{bn_conv_forward.2} parent=43 // pred_check
        %p1526 = pneg %p134
      $region50: #{bn_conv_forward.2} parent=43 // pred_check_branch
        %1528 = sbr.rel (%p1526) target = $region52
      $region51: #{bn_conv_forward.2} parent=43 // pred_region
        %p1529 = scmp.lt.s32.totalorder %s17, 1
        %s1530 = scalar_select %p1529, %s17, 1
        %s1531 = smul.addr %s1530, 2
        %s1532 = scalar_lea.vmem %s4, %s1531
      $region52: #{bn_conv_forward.2} parent=43 // pred_fallthru
        _
    $region44: #{bn_conv_forward.2} parent=5 // pred_fallthru
      _
  $region6: #{bn_conv_forward.2} parent=0 // loop_footer
    %s15 = sadd.s32 1, %s11
  $region7: #{bn_conv_forward.2} parent=0 // loop_footer_branch
    %10 = sbr.rel target = $region3
  $region8: #{bn_conv_forward.2} parent=0 // loop_exit
    _

</llo_original>
